<compile_context>
chip_gen: v7x
topology: tpu7x:2x2x1
jax: 0.10.0
libtpu: 0.0.40
codegen_flags: <defaults>
</compile_context>

<pallas_src>
import jax
import jax.numpy as jnp
from jax import lax
from jax.experimental import pallas as pl
from jax.experimental.pallas import tpu as pltpu


def svd_kernel(a_ref, u_ref, s_row_ref, s_col_ref, v_ref,
               loss_ref, peq_ref, pek_ref):
    N = a_ref.shape[0]
    H = u_ref.shape[1]

    U = u_ref[...]            # (N, H)
    V = v_ref[...]            # (H, N)
    s_row = s_row_ref[...]    # (1, H)
    s_col = s_col_ref[...]    # (H, 1)

    # Fold the 1/hidden_dim scale into S so it rides on the small (SLAB, H)
    # operand instead of a full VPU pass over the (N, N) matmul result.
    s_scaled = s_row * jnp.float32(1.0 / H)

    # ---- MSE(A, U @ diag(S) @ V / H) over row slabs --------------------------
    SLAB = 64 if N % 64 == 0 else N
    n_slabs = N // SLAB

    def mse_body(i, acc):
        r0 = pl.multiple_of(i * SLAB, SLAB)
        u_slab = u_ref[pl.ds(r0, SLAB), :] * s_scaled                   # (SLAB, H)
        new_a = jnp.dot(u_slab, V, preferred_element_type=jnp.float32)  # (SLAB, N)
        d = a_ref[pl.ds(r0, SLAB), :] - new_a
        return acc + jnp.sum(d * d, keepdims=True)                      # (1, 1)

    sse = lax.fori_loop(0, n_slabs, mse_body,
                        jnp.zeros((1, 1), jnp.float32), unroll=True)
    mse = sse * jnp.float32(1.0 / (N * N))

    # ---- orthogonality regularizers (Gram matrices via dot_general, no .T) ---
    row = lax.broadcasted_iota(jnp.int32, (H, H), 0)
    col = lax.broadcasted_iota(jnp.int32, (H, H), 1)
    eye = (row == col).astype(jnp.float32)

    # U^T U : contract dim 0 of both operands -> (H, H)
    utu = lax.dot_general(U, U, (((0,), (0,)), ((), ())),
                          preferred_element_type=jnp.float32) - eye
    # V V^T : contract dim 1 of both operands -> (H, H)
    vvt = lax.dot_general(V, V, (((1,), (1,)), ((), ())),
                          preferred_element_type=jnp.float32) - eye

    # Frobenius norms (torch.norm(X, p=2) with no dim flattens -> Frobenius).
    reg_u = 0.5 * jnp.sqrt(jnp.sum(utu * utu, keepdims=True))   # (1, 1)
    reg_v = 0.5 * jnp.sqrt(jnp.sum(vvt * vvt, keepdims=True))   # (1, 1)

    loss_ref[...] = mse + reg_u + reg_v

    # ---- sqrt(S)-scaled embeddings -------------------------------------------
    # pe_Q = U @ sqrt(diag(S))   -> (N, H)
    # pe_K = sqrt(diag(S)) @ V   -> emitted lane-dense as (H, N),
    #                               transposed to (N, H) in the wrapper.
    peq_ref[...] = U * jnp.sqrt(s_row)
    pek_ref[...] = jnp.sqrt(s_col) * V


def svd_forward(A, U, S, V):
    N, H = U.shape
    A = A.astype(jnp.float32)
    U = U.astype(jnp.float32)
    V = V.astype(jnp.float32)
    s_row = S.reshape(1, H).astype(jnp.float32)
    s_col = S.reshape(H, 1).astype(jnp.float32)

    vmem = pl.BlockSpec(memory_space=pltpu.MemorySpace.VMEM)
    out_shapes = (
        jax.ShapeDtypeStruct((1, 1), jnp.float32),   # loss
        jax.ShapeDtypeStruct((N, H), jnp.float32),   # pe_Q
        jax.ShapeDtypeStruct((H, N), jnp.float32),   # pe_K (lane-dense layout)
    )
    loss, pe_q, pe_k_hn = pl.pallas_call(
        svd_kernel,
        out_shape=out_shapes,
        in_specs=[vmem, vmem, vmem, vmem, vmem],
        out_specs=(vmem, vmem, vmem),
    )(A, U, s_row, s_col, V)

    # Present pe_K in the module's (N, H) layout; transpose happens in XLA,
    # outside the kernel, on a 32 KiB tensor (layout plumbing only).
    return loss[0, 0], pe_q, pe_k_hn.T


def svd_reference(A, U, S, V):
    # pure-JAX reference mirroring the PyTorch forward
    H = U.shape[1]
    new_A = (U * S[None, :]) @ V / H
    mse = jnp.mean((A - new_A) ** 2)
    eye = jnp.eye(H, dtype=jnp.float32)
    reg_u = 0.5 * jnp.linalg.norm(U.T @ U - eye)
    reg_v = 0.5 * jnp.linalg.norm(V @ V.T - eye)
    loss = mse + reg_u + reg_v
    pe_q = U * jnp.sqrt(S)[None, :]
    pe_k = (jnp.sqrt(S)[:, None] * V).T
    return loss, pe_q, pe_k


if __name__ == "__main__":
    N, H = 256, 32

    key = jax.random.PRNGKey(0)
    k_u, k_v, k_s, k_a = jax.random.split(key, 4)

    # Parameters consistent with the module's __init__ (U, V ~ rand). S is
    # initialized to ones in the module; use a positive random S here so the
    # sqrt(S) scaling path is actually exercised by the correctness check.
    U = jax.random.uniform(k_u, (N, H), dtype=jnp.float32)
    S = jax.random.uniform(k_s, (H,), dtype=jnp.float32, minval=0.5, maxval=1.5)
    V = jax.random.uniform(k_v, (H, N), dtype=jnp.float32)

    # Example target matrix A (the forward's single input)
    A = jax.random.uniform(k_a, (N, N), dtype=jnp.float32)

    loss, pe_q, pe_k = svd_forward(A, U, S, V)
    jax.block_until_ready((loss, pe_q, pe_k))

    loss_r, pe_q_r, pe_k_r = svd_reference(A, U, S, V)
    assert jnp.allclose(loss, loss_r, rtol=1e-3, atol=1e-3), (loss, loss_r)
    assert jnp.allclose(pe_q, pe_q_r, rtol=1e-4, atol=1e-4)
    assert jnp.allclose(pe_k, pe_k_r, rtol=1e-4, atol=1e-4)

    # TODO(synk): if this runs per training step, add a leading batch grid axis
    # with dimension_semantics=("parallel",) so both v7x TensorCores are used,
    # and fuse the backward via custom_vjp — the forward is launch/DMA bound.
    print("KERNEL_OK")
</pallas_src>

<mosaic_0001>
module attributes {stable_mosaic.version = 11 : i64} {
  func.func @svd_kernel(%arg0: memref<256x256xf32, #tpu.memory_space<vmem>>, %arg1: memref<256x32xf32, #tpu.memory_space<vmem>>, %arg2: memref<1x32xf32, #tpu.memory_space<vmem>>, %arg3: memref<32x1xf32, #tpu.memory_space<vmem>>, %arg4: memref<32x256xf32, #tpu.memory_space<vmem>>, %arg5: memref<1x1xf32, #tpu.memory_space<vmem>>, %arg6: memref<256x32xf32, #tpu.memory_space<vmem>>, %arg7: memref<32x256xf32, #tpu.memory_space<vmem>>) attributes {dimension_semantics = [], scalar_prefetch = 0 : i64, scratch_operands = 0 : i64, tpu.core_type = #tpu.core_type<tc>} {
    %c0 = arith.constant 0 : index
    %c0_0 = arith.constant 0 : index
    %0 = vector.load %arg1[%c0, %c0_0] : memref<256x32xf32, #tpu.memory_space<vmem>>, vector<256x32xf32>
    %c0_1 = arith.constant 0 : index
    %c0_2 = arith.constant 0 : index
    %1 = vector.load %arg4[%c0_1, %c0_2] : memref<32x256xf32, #tpu.memory_space<vmem>>, vector<32x256xf32>
    %c0_3 = arith.constant 0 : index
    %c0_4 = arith.constant 0 : index
    %2 = vector.load %arg2[%c0_3, %c0_4] : memref<1x32xf32, #tpu.memory_space<vmem>>, vector<1x32xf32>
    %c0_5 = arith.constant 0 : index
    %c0_6 = arith.constant 0 : index
    %3 = vector.load %arg3[%c0_5, %c0_6] : memref<32x1xf32, #tpu.memory_space<vmem>>, vector<32x1xf32>
    %cst = arith.constant 3.125000e-02 : f32
    %4 = vector.broadcast %cst : f32 to vector<1x32xf32>
    %5 = arith.mulf %2, %4 : vector<1x32xf32>
    %cst_7 = arith.constant 0.000000e+00 : f32
    %6 = vector.broadcast %cst_7 : f32 to vector<1x1xf32>
    %c0_i32 = arith.constant 0 : i32
    %c64_i32 = arith.constant 64 : i32
    %7 = arith.muli %c0_i32, %c64_i32 : i32
    %8 = tpu.assume_multiple %7, 64 : i32
    %9 = arith.index_cast %8 : i32 to index
    %c0_8 = arith.constant 0 : index
    %10 = vector.load %arg1[%9, %c0_8] : memref<256x32xf32, #tpu.memory_space<vmem>>, vector<64x32xf32>
    %11 = vector.broadcast %5 : vector<1x32xf32> to vector<64x32xf32>
    %12 = arith.mulf %10, %11 : vector<64x32xf32>
    %cst_9 = arith.constant dense<0.000000e+00> : vector<64x256xf32>
    %13 = tpu.matmul %12, %1, %cst_9 {dimension_numbers = #tpu.dot_dimension_numbers<[1], [0], [0], [1], [0, 0, 1, 1], [], []>} : vector<64x32xf32>, vector<32x256xf32>, vector<64x256xf32> -> vector<64x256xf32>
    %14 = arith.index_cast %8 : i32 to index
    %c0_10 = arith.constant 0 : index
    %15 = vector.load %arg0[%14, %c0_10] : memref<256x256xf32, #tpu.memory_space<vmem>>, vector<64x256xf32>
    %16 = arith.subf %15, %13 : vector<64x256xf32>
    %17 = arith.mulf %16, %16 : vector<64x256xf32>
    %18 = vector.shape_cast %17 : vector<64x256xf32> to vector<1x64x256xf32>
    %cst_11 = arith.constant dense<0.000000e+00> : vector<1xf32>
    %19 = vector.multi_reduction <add>, %18, %cst_11 [1, 2] : vector<1x64x256xf32> to vector<1xf32>
    %20 = vector.shape_cast %19 : vector<1xf32> to vector<1x1x1xf32>
    %21 = vector.extract %20[0, 0, 0] : f32 from vector<1x1x1xf32>
    %22 = vector.broadcast %21 : f32 to vector<1x1xf32>
    %23 = arith.addf %6, %22 : vector<1x1xf32>
    %c1_i32 = arith.constant 1 : i32
    %c64_i32_12 = arith.constant 64 : i32
    %24 = arith.muli %c1_i32, %c64_i32_12 : i32
    %25 = tpu.assume_multiple %24, 64 : i32
    %26 = arith.index_cast %25 : i32 to index
    %c0_13 = arith.constant 0 : index
    %27 = vector.load %arg1[%26, %c0_13] : memref<256x32xf32, #tpu.memory_space<vmem>>, vector<64x32xf32>
    %28 = vector.broadcast %5 : vector<1x32xf32> to vector<64x32xf32>
    %29 = arith.mulf %27, %28 : vector<64x32xf32>
    %cst_14 = arith.constant dense<0.000000e+00> : vector<64x256xf32>
    %30 = tpu.matmul %29, %1, %cst_14 {dimension_numbers = #tpu.dot_dimension_numbers<[1], [0], [0], [1], [0, 0, 1, 1], [], []>} : vector<64x32xf32>, vector<32x256xf32>, vector<64x256xf32> -> vector<64x256xf32>
    %31 = arith.index_cast %25 : i32 to index
    %c0_15 = arith.constant 0 : index
    %32 = vector.load %arg0[%31, %c0_15] : memref<256x256xf32, #tpu.memory_space<vmem>>, vector<64x256xf32>
    %33 = arith.subf %32, %30 : vector<64x256xf32>
    %34 = arith.mulf %33, %33 : vector<64x256xf32>
    %35 = vector.shape_cast %34 : vector<64x256xf32> to vector<1x64x256xf32>
    %cst_16 = arith.constant dense<0.000000e+00> : vector<1xf32>
    %36 = vector.multi_reduction <add>, %35, %cst_16 [1, 2] : vector<1x64x256xf32> to vector<1xf32>
    %37 = vector.shape_cast %36 : vector<1xf32> to vector<1x1x1xf32>
    %38 = vector.extract %37[0, 0, 0] : f32 from vector<1x1x1xf32>
    %39 = vector.broadcast %38 : f32 to vector<1x1xf32>
    %40 = arith.addf %23, %39 : vector<1x1xf32>
    %c2_i32 = arith.constant 2 : i32
    %c64_i32_17 = arith.constant 64 : i32
    %41 = arith.muli %c2_i32, %c64_i32_17 : i32
    %42 = tpu.assume_multiple %41, 64 : i32
    %43 = arith.index_cast %42 : i32 to index
    %c0_18 = arith.constant 0 : index
    %44 = vector.load %arg1[%43, %c0_18] : memref<256x32xf32, #tpu.memory_space<vmem>>, vector<64x32xf32>
    %45 = vector.broadcast %5 : vector<1x32xf32> to vector<64x32xf32>
    %46 = arith.mulf %44, %45 : vector<64x32xf32>
    %cst_19 = arith.constant dense<0.000000e+00> : vector<64x256xf32>
    %47 = tpu.matmul %46, %1, %cst_19 {dimension_numbers = #tpu.dot_dimension_numbers<[1], [0], [0], [1], [0, 0, 1, 1], [], []>} : vector<64x32xf32>, vector<32x256xf32>, vector<64x256xf32> -> vector<64x256xf32>
    %48 = arith.index_cast %42 : i32 to index
    %c0_20 = arith.constant 0 : index
    %49 = vector.load %arg0[%48, %c0_20] : memref<256x256xf32, #tpu.memory_space<vmem>>, vector<64x256xf32>
    %50 = arith.subf %49, %47 : vector<64x256xf32>
    %51 = arith.mulf %50, %50 : vector<64x256xf32>
    %52 = vector.shape_cast %51 : vector<64x256xf32> to vector<1x64x256xf32>
    %cst_21 = arith.constant dense<0.000000e+00> : vector<1xf32>
    %53 = vector.multi_reduction <add>, %52, %cst_21 [1, 2] : vector<1x64x256xf32> to vector<1xf32>
    %54 = vector.shape_cast %53 : vector<1xf32> to vector<1x1x1xf32>
    %55 = vector.extract %54[0, 0, 0] : f32 from vector<1x1x1xf32>
    %56 = vector.broadcast %55 : f32 to vector<1x1xf32>
    %57 = arith.addf %40, %56 : vector<1x1xf32>
    %c3_i32 = arith.constant 3 : i32
    %c64_i32_22 = arith.constant 64 : i32
    %58 = arith.muli %c3_i32, %c64_i32_22 : i32
    %59 = tpu.assume_multiple %58, 64 : i32
    %60 = arith.index_cast %59 : i32 to index
    %c0_23 = arith.constant 0 : index
    %61 = vector.load %arg1[%60, %c0_23] : memref<256x32xf32, #tpu.memory_space<vmem>>, vector<64x32xf32>
    %62 = vector.broadcast %5 : vector<1x32xf32> to vector<64x32xf32>
    %63 = arith.mulf %61, %62 : vector<64x32xf32>
    %cst_24 = arith.constant dense<0.000000e+00> : vector<64x256xf32>
    %64 = tpu.matmul %63, %1, %cst_24 {dimension_numbers = #tpu.dot_dimension_numbers<[1], [0], [0], [1], [0, 0, 1, 1], [], []>} : vector<64x32xf32>, vector<32x256xf32>, vector<64x256xf32> -> vector<64x256xf32>
    %65 = arith.index_cast %59 : i32 to index
    %c0_25 = arith.constant 0 : index
    %66 = vector.load %arg0[%65, %c0_25] : memref<256x256xf32, #tpu.memory_space<vmem>>, vector<64x256xf32>
    %67 = arith.subf %66, %64 : vector<64x256xf32>
    %68 = arith.mulf %67, %67 : vector<64x256xf32>
    %69 = vector.shape_cast %68 : vector<64x256xf32> to vector<1x64x256xf32>
    %cst_26 = arith.constant dense<0.000000e+00> : vector<1xf32>
    %70 = vector.multi_reduction <add>, %69, %cst_26 [1, 2] : vector<1x64x256xf32> to vector<1xf32>
    %71 = vector.shape_cast %70 : vector<1xf32> to vector<1x1x1xf32>
    %72 = vector.extract %71[0, 0, 0] : f32 from vector<1x1x1xf32>
    %73 = vector.broadcast %72 : f32 to vector<1x1xf32>
    %74 = arith.addf %57, %73 : vector<1x1xf32>
    %c4_i32 = arith.constant 4 : i32
    %cst_27 = arith.constant 1.52587891E-5 : f32
    %75 = vector.broadcast %cst_27 : f32 to vector<1x1xf32>
    %76 = arith.mulf %74, %75 : vector<1x1xf32>
    %77 = tpu.iota {dimensions = array<i32: 0>} : vector<32x32xi32>
    %78 = tpu.iota {dimensions = array<i32: 1>} : vector<32x32xi32>
    %79 = arith.cmpi eq, %77, %78 : vector<32x32xi32>
    %80 = arith.extui %79 : vector<32x32xi1> to vector<32x32xi32>
    %81 = arith.sitofp %80 : vector<32x32xi32> to vector<32x32xf32>
    %cst_28 = arith.constant dense<0.000000e+00> : vector<32x32xf32>
    %82 = tpu.matmul %0, %0, %cst_28 {dimension_numbers = #tpu.dot_dimension_numbers<[0], [0], [1], [1], [0, 1, 1, 1], [], []>} : vector<256x32xf32>, vector<256x32xf32>, vector<32x32xf32> -> vector<32x32xf32>
    %83 = arith.subf %82, %81 : vector<32x32xf32>
    %cst_29 = arith.constant dense<0.000000e+00> : vector<32x32xf32>
    %84 = tpu.matmul %1, %1, %cst_29 {dimension_numbers = #tpu.dot_dimension_numbers<[1], [1], [0], [0], [0, 0, 1, 0], [], []>} : vector<32x256xf32>, vector<32x256xf32>, vector<32x32xf32> -> vector<32x32xf32>
    %85 = arith.subf %84, %81 : vector<32x32xf32>
    %86 = arith.mulf %83, %83 : vector<32x32xf32>
    %87 = vector.shape_cast %86 : vector<32x32xf32> to vector<1x32x32xf32>
    %cst_30 = arith.constant dense<0.000000e+00> : vector<1xf32>
    %88 = vector.multi_reduction <add>, %87, %cst_30 [1, 2] : vector<1x32x32xf32> to vector<1xf32>
    %89 = vector.shape_cast %88 : vector<1xf32> to vector<1x1x1xf32>
    %90 = vector.extract %89[0, 0, 0] : f32 from vector<1x1x1xf32>
    %91 = vector.broadcast %90 : f32 to vector<1x1xf32>
    %92 = math.sqrt %91 : vector<1x1xf32>
    %cst_31 = arith.constant 5.000000e-01 : f32
    %93 = vector.broadcast %cst_31 : f32 to vector<1x1xf32>
    %94 = arith.mulf %93, %92 : vector<1x1xf32>
    %95 = arith.mulf %85, %85 : vector<32x32xf32>
    %96 = vector.shape_cast %95 : vector<32x32xf32> to vector<1x32x32xf32>
    %cst_32 = arith.constant dense<0.000000e+00> : vector<1xf32>
    %97 = vector.multi_reduction <add>, %96, %cst_32 [1, 2] : vector<1x32x32xf32> to vector<1xf32>
    %98 = vector.shape_cast %97 : vector<1xf32> to vector<1x1x1xf32>
    %99 = vector.extract %98[0, 0, 0] : f32 from vector<1x1x1xf32>
    %100 = vector.broadcast %99 : f32 to vector<1x1xf32>
    %101 = math.sqrt %100 : vector<1x1xf32>
    %cst_33 = arith.constant 5.000000e-01 : f32
    %102 = vector.broadcast %cst_33 : f32 to vector<1x1xf32>
    %103 = arith.mulf %102, %101 : vector<1x1xf32>
    %104 = arith.addf %76, %94 : vector<1x1xf32>
    %105 = arith.addf %104, %103 : vector<1x1xf32>
    %c0_34 = arith.constant 0 : index
    %c0_35 = arith.constant 0 : index
    %106 = vector.load %arg5[%c0_34, %c0_35] : memref<1x1xf32, #tpu.memory_space<vmem>>, vector<1x1xf32>
    tpu.vector_store %arg5[%c0_34, %c0_35], %105 {strides = array<i32>} : memref<1x1xf32, #tpu.memory_space<vmem>>, vector<1x1xf32>,
    %107 = math.sqrt %2 : vector<1x32xf32>
    %108 = vector.broadcast %107 : vector<1x32xf32> to vector<256x32xf32>
    %109 = arith.mulf %0, %108 : vector<256x32xf32>
    %c0_36 = arith.constant 0 : index
    %c0_37 = arith.constant 0 : index
    %110 = vector.load %arg6[%c0_36, %c0_37] : memref<256x32xf32, #tpu.memory_space<vmem>>, vector<256x32xf32>
    tpu.vector_store %arg6[%c0_36, %c0_37], %109 {strides = array<i32>} : memref<256x32xf32, #tpu.memory_space<vmem>>, vector<256x32xf32>,
    %111 = math.sqrt %3 : vector<32x1xf32>
    %112 = vector.broadcast %111 : vector<32x1xf32> to vector<32x256xf32>
    %113 = arith.mulf %112, %1 : vector<32x256xf32>
    %c0_38 = arith.constant 0 : index
    %c0_39 = arith.constant 0 : index
    %114 = vector.load %arg7[%c0_38, %c0_39] : memref<32x256xf32, #tpu.memory_space<vmem>>, vector<32x256xf32>
    tpu.vector_store %arg7[%c0_38, %c0_39], %113 {strides = array<i32>} : memref<32x256xf32, #tpu.memory_space<vmem>>, vector<32x256xf32>,
    return
  }
}

</mosaic_0001>

<llo_original>
// kernel: tpu_custom_call.1
$region0: #{tpu_custom_call.1}
  #allocation0 [shape = 'u32[]', space=smem, size = 0x4, offset = 0x4, fixed_abs, tag = 'smem constant byte address 0x4 - core index']
  #allocation1 [shape = 'u32[144,128]{1,0:T(1,128)}', space=vmem, size = 0x12000, scoped, tag = 'internal scratch']
  %s0 = inlined_call_operand.hbm [shape: f32[256,256], index: 0, kind: input, shape index: {}]
  %s1 = inlined_call_operand.vmem [shape: f32[256,32], index: 1, kind: input, shape index: {}]
  %s2 = inlined_call_operand.vmem [shape: f32[1,32], index: 2, kind: input, shape index: {}]
  %s3 = inlined_call_operand.vmem [shape: f32[32,1], index: 3, kind: input, shape index: {}]
  %s4 = inlined_call_operand.vmem [shape: f32[32,256], index: 4, kind: input, shape index: {}]
  %s5 = inlined_call_operand.hbm [shape: f32[1,1], index: 5, kind: output, shape index: {0}]
  %s6 = inlined_call_operand.vmem [shape: f32[256,32], index: 6, kind: output, shape index: {1}]
  %s7 = inlined_call_operand.hbm [shape: f32[32,256], index: 7, kind: output, shape index: {2}]
  %8 = xla_tuple %s5, %s6, %s7
  %s9 = sld [smem:[#allocation0]]
  $region50: #{tpu_custom_call.1} parent=0
    _
  %s11 = ssub.s32 1, %s9
  %s12 = scalar_select 0, %s11, %s9
  $region1: #{tpu_custom_call.1} parent=0
    #allocation2 [shape = 'u8[262144]{0}', space=vmem, size = 0x40000, scoped, tag = 'input window, operand 0, single buffered']
    #allocation3 [shape = 's32[1]{0}', space=sflag, size = 0x4, scoped, tag = 'scoped memory for tpu_custom_call.1']
    #allocation4 [shape = 's32[1]{0}', space=sflag, size = 0x4, scoped, tag = 'scoped memory for tpu_custom_call.1']
    #allocation5 [shape = 'u8[512]{0}', space=vmem, size = 0x400, scoped, tag = 'output window, operand 0, single buffered']
    #allocation6 [shape = 'u8[32768]{0}', space=vmem, size = 0x8000, scoped, tag = 'output window, operand 2, single buffered']
    #allocation7 [shape = 's32[1]{0}', space=sflag, size = 0x4, scoped, tag = 'scoped memory for tpu_custom_call.1']
    %13 = vsyncpa [#allocation3], 0
    %14 = vsyncpa [#allocation4], 0
    %15 = vsyncpa [#allocation7], 0
    // Predicated region
    $region2: #{tpu_custom_call.1} parent=1 // pred_check
      _
    $region3: #{tpu_custom_call.1} parent=1 // pred_check_branch
      %17 = sbr.rel (0) target = $region5
    $region4: #{tpu_custom_call.1} parent=1 // pred_region
      %s19 = ssub.s32 8192, 8192
      %20 = vsyncadd [#allocation3], %s19
      %s21 = sshll.u32 [#allocation2], 4
      %s22 = int_to_ptr.vmem [resolvable:$true] %s21
      %27 = dma.hbm_to_vmem [thread:$0]  %s0, 8192, %s22, [#allocation3], 256, 256, 16
    $region5: #{tpu_custom_call.1} parent=1 // pred_fallthru
      _
    // Predicated region
    $region6: #{tpu_custom_call.1} parent=1 // pred_check
      _
    $region7: #{tpu_custom_call.1} parent=1 // pred_check_branch
      %29 = sbr.rel (0) target = $region9
    $region8: #{tpu_custom_call.1} parent=1 // pred_region
      _
    $region9: #{tpu_custom_call.1} parent=1 // pred_fallthru
      _
    // Predicated region
    $region10: #{tpu_custom_call.1} parent=1 // pred_check
      _
    $region11: #{tpu_custom_call.1} parent=1 // pred_check_branch
      %31 = sbr.rel (0) target = $region13
    $region12: #{tpu_custom_call.1} parent=1 // pred_region
      _
    $region13: #{tpu_custom_call.1} parent=1 // pred_fallthru
      _
    // Predicated region
    $region14: #{tpu_custom_call.1} parent=1 // pred_check
      _
    $region15: #{tpu_custom_call.1} parent=1 // pred_check_branch
      %33 = sbr.rel (0) target = $region17
    $region16: #{tpu_custom_call.1} parent=1 // pred_region
      _
    $region17: #{tpu_custom_call.1} parent=1 // pred_fallthru
      _
    // Predicated region
    $region18: #{tpu_custom_call.1} parent=1 // pred_check
      _
    $region19: #{tpu_custom_call.1} parent=1 // pred_check_branch
      %35 = sbr.rel (0) target = $region21
    $region20: #{tpu_custom_call.1} parent=1 // pred_region
      _
    $region21: #{tpu_custom_call.1} parent=1 // pred_fallthru
      _
    // Predicated region
    $region22: #{tpu_custom_call.1} parent=1 // pred_check
      _
    $region23: #{tpu_custom_call.1} parent=1 // pred_check_branch
      %37 = sbr.rel (0) target = $region25
    $region24: #{tpu_custom_call.1} parent=1 // pred_region
      %38 = dma.done [#allocation3], 8192
    $region25: #{tpu_custom_call.1} parent=1 // pred_fallthru
      _
    %v39 = vld [vmem:[%s1] sm:$0xff]
    %v40 = vld [vmem:[%s1 + $0x8] sm:$0xff]
    %v41 = vld [vmem:[%s1 + $0x10] sm:$0xff]
    %v42 = vld [vmem:[%s1 + $0x18] sm:$0xff]
    %v43 = vld [vmem:[%s1 + $0x20] sm:$0xff]
    %v44 = vld [vmem:[%s1 + $0x28] sm:$0xff]
    %v45 = vld [vmem:[%s1 + $0x30] sm:$0xff]
    %v46 = vld [vmem:[%s1 + $0x38] sm:$0xff]
    %v47 = vld [vmem:[%s1 + $0x40] sm:$0xff]
    %v48 = vld [vmem:[%s1 + $0x48] sm:$0xff]
    %v49 = vld [vmem:[%s1 + $0x50] sm:$0xff]
    %v50 = vld [vmem:[%s1 + $0x58] sm:$0xff]
    %v51 = vld [vmem:[%s1 + $0x60] sm:$0xff]
    %v52 = vld [vmem:[%s1 + $0x68] sm:$0xff]
    %v53 = vld [vmem:[%s1 + $0x70] sm:$0xff]
    %v54 = vld [vmem:[%s1 + $0x78] sm:$0xff]
    %v55 = vld [vmem:[%s1 + $0x80] sm:$0xff]
    %v56 = vld [vmem:[%s1 + $0x88] sm:$0xff]
    %v57 = vld [vmem:[%s1 + $0x90] sm:$0xff]
    %v58 = vld [vmem:[%s1 + $0x98] sm:$0xff]
    %v59 = vld [vmem:[%s1 + $0xa0] sm:$0xff]
    %v60 = vld [vmem:[%s1 + $0xa8] sm:$0xff]
    %v61 = vld [vmem:[%s1 + $0xb0] sm:$0xff]
    %v62 = vld [vmem:[%s1 + $0xb8] sm:$0xff]
    %v63 = vld [vmem:[%s1 + $0xc0] sm:$0xff]
    %v64 = vld [vmem:[%s1 + $0xc8] sm:$0xff]
    %v65 = vld [vmem:[%s1 + $0xd0] sm:$0xff]
    %v66 = vld [vmem:[%s1 + $0xd8] sm:$0xff]
    %v67 = vld [vmem:[%s1 + $0xe0] sm:$0xff]
    %v68 = vld [vmem:[%s1 + $0xe8] sm:$0xff]
    %v69 = vld [vmem:[%s1 + $0xf0] sm:$0xff]
    %v70 = vld [vmem:[%s1 + $0xf8] sm:$0xff]
    %v71 = vld [vmem:[%s4] sm:$0xff]
    %v72 = vld [vmem:[%s4 + $0x8] sm:$0xff]
    %v73 = vld [vmem:[%s4 + $0x10] sm:$0xff]
    %v74 = vld [vmem:[%s4 + $0x18] sm:$0xff]
    %v75 = vld [vmem:[%s4 + $0x20] sm:$0xff]
    %v76 = vld [vmem:[%s4 + $0x28] sm:$0xff]
    %v77 = vld [vmem:[%s4 + $0x30] sm:$0xff]
    %v78 = vld [vmem:[%s4 + $0x38] sm:$0xff]
    %v79 = vld [vmem:[%s2] sm:$0x1]
    %v80 = vld [vmem:[%s3] sm:$0xff]
    %v81 = vld [vmem:[%s3 + $0x8] sm:$0xff]
    %v82 = vld [vmem:[%s3 + $0x10] sm:$0xff]
    %v83 = vld [vmem:[%s3 + $0x18] sm:$0xff]
    %v84 = vmul.f32 %v79, 0.03125
    %v85 = vld [vmem:[%s1] sm:$0xff]
    %v86 = vld [vmem:[%s1 + $0x8] sm:$0xff]
    %v87 = vld [vmem:[%s1 + $0x10] sm:$0xff]
    %v88 = vld [vmem:[%s1 + $0x18] sm:$0xff]
    %v89 = vld [vmem:[%s1 + $0x20] sm:$0xff]
    %v90 = vld [vmem:[%s1 + $0x28] sm:$0xff]
    %v91 = vld [vmem:[%s1 + $0x30] sm:$0xff]
    %v92 = vld [vmem:[%s1 + $0x38] sm:$0xff]
    %v94 = vlaneseq
    %v95 = vshrl.u32 %v94, 7
    %v96 = vsub.s32 0, %v95
    %v97 = vrot.slane %v84, %v96
    %v99 = vmul.f32 %v85, %v97
    %v100 = vmul.f32 %v86, %v97
    %v101 = vmul.f32 %v87, %v97
    %v102 = vmul.f32 %v88, %v97
    %v103 = vmul.f32 %v89, %v97
    %v104 = vmul.f32 %v90, %v97
    %v105 = vmul.f32 %v91, %v97
    %v106 = vmul.f32 %v92, %v97
    %vm107 = vcmask 261120
    %v109 = vsel %vm107, %v99, 0
    %v112 = vsel %vm107, %v100, 0
    %v115 = vsel %vm107, %v101, 0
    %v118 = vsel %vm107, %v102, 0
    %v121 = vsel %vm107, %v103, 0
    %v124 = vsel %vm107, %v104, 0
    %v127 = vsel %vm107, %v105, 0
    %v130 = vsel %vm107, %v106, 0
    %132 = vmatprep.subr.mxu0 %v72
    %133 = vmatpush1.msra.mxu0 %v71
    %134 = vmatprep.subr.mxu0 %v74
    %135 = vmatpush1.msra.mxu0 %v73
    %136 = vmatprep.subr.mxu0 %v76
    %137 = vmatpush1.msra.mxu0 %v75
    %138 = vmatprep.subr.mxu0 %v78
    %139 = vmatpush1.msra.mxu0 %v77
    %140 = vmatprep.subr.mxu0 0.0
    %141 = vmatpush1.msra.mxu0 0.0
    %142 = vmatprep.subr.mxu0 0.0
    %143 = vmatpush1.msra.mxu0 0.0
    %144 = vmatprep.subr.mxu0 0.0
    %145 = vmatpush1.msra.mxu0 0.0
    %146 = vmatprep.subr.mxu0 0.0
    %147 = vmatpush1.msra.mxu0 0.0
    %148 = vmatprep.subr.mxu0 0.0
    %149 = vmatpush1.msra.mxu0 0.0
    %150 = vmatprep.subr.mxu0 0.0
    %151 = vmatpush1.msra.mxu0 0.0
    %152 = vmatprep.subr.mxu0 0.0
    %153 = vmatpush1.msra.mxu0 0.0
    %154 = vmatprep.subr.mxu0 0.0
    %155 = vmatpush1.msra.mxu0 0.0
    %156 = vmatprep.subr.mxu0 0.0
    %157 = vmatpush1.msra.mxu0 0.0
    %158 = vmatprep.subr.mxu0 0.0
    %159 = vmatpush1.msra.mxu0 0.0
    %160 = vmatprep.subr.mxu0 0.0
    %161 = vmatpush1.msra.mxu0 0.0
    %162 = vmatprep.subr.mxu0 0.0
    %163 = vmatpush1.msra.mxu0 0.0
    %164 = vmatprep.subr.mxu0 0.0
    %165 = vmatpush1.msra.mxu0 0.0
    %166 = vmatprep.subr.mxu0 0.0
    %167 = vmatpush1.msra.mxu0 0.0
    %168 = vmatprep.subr.mxu0 0.0
    %169 = vmatpush1.msra.mxu0 0.0
    %170 = vmatprep.subr.mxu0 0.0
    %171 = vmatpush1.msra.mxu0 0.0
    %172 = vmatprep.subr.mxu0 0.0
    %173 = vmatpush1.msra.mxu0 0.0
    %174 = vmatprep.subr.mxu0 0.0
    %175 = vmatpush1.msra.mxu0 0.0
    %176 = vmatprep.subr.mxu0 0.0
    %177 = vmatpush1.msra.mxu0 0.0
    %178 = vmatprep.subr.mxu0 0.0
    %179 = vmatpush1.msra.mxu0 0.0
    %180 = vmatprep.subr.mxu0 0.0
    %181 = vmatpush1.msra.mxu0 0.0
    %182 = vmatprep.subr.mxu0 0.0
    %183 = vmatpush1.msra.mxu0 0.0
    %184 = vmatprep.subr.mxu0 0.0
    %185 = vmatpush1.msra.mxu0 0.0
    %186 = vmatprep.subr.mxu0 0.0
    %187 = vmatpush1.msra.mxu0 0.0
    %188 = vmatprep.subr.mxu0 0.0
    %189 = vmatpush1.msra.mxu0 0.0
    %190 = vmatprep.subr.mxu0 0.0
    %191 = vmatpush1.msra.mxu0 0.0
    %192 = vmatprep.subr.mxu0 0.0
    %193 = vmatpush1.msra.mxu0 0.0
    %194 = vmatprep.subr.mxu0 0.0
    %195 = vmatpush1.msra.mxu0 0.0
    %196 = vmatprep.mubr.f32.mxu0 0.0
    %197 = vmatmul.mubr.f32.gmra.mrb[0].mxu0 %v109
    %v198 = vpop.f32.mrb[0].mxu0
    %v199 = vadd.f32 0.0, %v198
    %v200 = vpop.f32.mrb[0].mxu0
    %v201 = vadd.f32 0.0, %v200
    %202 = vmatprep.mubr.f32.mxu0 0.0
    %203 = vmatmul.mubr.f32.gmra.mrb[0].mxu0 %v112
    %v204 = vpop.f32.mrb[0].mxu0
    %v205 = vadd.f32 0.0, %v204
    %v206 = vpop.f32.mrb[0].mxu0
    %v207 = vadd.f32 0.0, %v206
    %208 = vmatprep.mubr.f32.mxu0 0.0
    %209 = vmatmul.mubr.f32.gmra.mrb[0].mxu0 %v115
    %v210 = vpop.f32.mrb[0].mxu0
    %v211 = vadd.f32 0.0, %v210
    %v212 = vpop.f32.mrb[0].mxu0
    %v213 = vadd.f32 0.0, %v212
    %214 = vmatprep.mubr.f32.mxu0 0.0
    %215 = vmatmul.mubr.f32.gmra.mrb[0].mxu0 %v118
    %v216 = vpop.f32.mrb[0].mxu0
    %v217 = vadd.f32 0.0, %v216
    %v218 = vpop.f32.mrb[0].mxu0
    %v219 = vadd.f32 0.0, %v218
    %220 = vmatprep.mubr.f32.mxu0 0.0
    %221 = vmatmul.mubr.f32.gmra.mrb[0].mxu0 %v121
    %v222 = vpop.f32.mrb[0].mxu0
    %v223 = vadd.f32 0.0, %v222
    %v224 = vpop.f32.mrb[0].mxu0
    %v225 = vadd.f32 0.0, %v224
    %226 = vmatprep.mubr.f32.mxu0 0.0
    %227 = vmatmul.mubr.f32.gmra.mrb[0].mxu0 %v124
    %v228 = vpop.f32.mrb[0].mxu0
    %v229 = vadd.f32 0.0, %v228
    %v230 = vpop.f32.mrb[0].mxu0
    %v231 = vadd.f32 0.0, %v230
    %232 = vmatprep.mubr.f32.mxu0 0.0
    %233 = vmatmul.mubr.f32.gmra.mrb[0].mxu0 %v127
    %v234 = vpop.f32.mrb[0].mxu0
    %v235 = vadd.f32 0.0, %v234
    %v236 = vpop.f32.mrb[0].mxu0
    %v237 = vadd.f32 0.0, %v236
    %238 = vmatprep.mubr.f32.mxu0 0.0
    %239 = vmatmul.mubr.f32.gmra.mrb[0].mxu0 %v130
    %v240 = vpop.f32.mrb[0].mxu0
    %v241 = vadd.f32 0.0, %v240
    %v242 = vpop.f32.mrb[0].mxu0
    %v243 = vadd.f32 0.0, %v242
    %244 = vdwg.mxu0
    %s245 = smul.u32 0, 2
    %s246 = smul.addr %s245, 8
    %s247 = scalar_lea.vmem [#allocation2], %s246
    %v248 = vld [vmem:[%s247] sm:$0xff]
    %v249 = vld [vmem:[%s247 + $0x8] sm:$0xff]
    %v250 = vld [vmem:[%s247 + $0x10] sm:$0xff]
    %v251 = vld [vmem:[%s247 + $0x18] sm:$0xff]
    %v252 = vld [vmem:[%s247 + $0x20] sm:$0xff]
    %v253 = vld [vmem:[%s247 + $0x28] sm:$0xff]
    %v254 = vld [vmem:[%s247 + $0x30] sm:$0xff]
    %v255 = vld [vmem:[%s247 + $0x38] sm:$0xff]
    %v256 = vld [vmem:[%s247 + $0x40] sm:$0xff]
    %v257 = vld [vmem:[%s247 + $0x48] sm:$0xff]
    %v258 = vld [vmem:[%s247 + $0x50] sm:$0xff]
    %v259 = vld [vmem:[%s247 + $0x58] sm:$0xff]
    %v260 = vld [vmem:[%s247 + $0x60] sm:$0xff]
    %v261 = vld [vmem:[%s247 + $0x68] sm:$0xff]
    %v262 = vld [vmem:[%s247 + $0x70] sm:$0xff]
    %v263 = vld [vmem:[%s247 + $0x78] sm:$0xff]
    %v264 = vsub.f32 %v248, %v199
    %v265 = vsub.f32 %v249, %v201
    %v266 = vsub.f32 %v250, %v205
    %v267 = vsub.f32 %v251, %v207
    %v268 = vsub.f32 %v252, %v211
    %v269 = vsub.f32 %v253, %v213
    %v270 = vsub.f32 %v254, %v217
    %v271 = vsub.f32 %v255, %v219
    %v272 = vsub.f32 %v256, %v223
    %v273 = vsub.f32 %v257, %v225
    %v274 = vsub.f32 %v258, %v229
    %v275 = vsub.f32 %v259, %v231
    %v276 = vsub.f32 %v260, %v235
    %v277 = vsub.f32 %v261, %v237
    %v278 = vsub.f32 %v262, %v241
    %v279 = vsub.f32 %v263, %v243
    %v280 = vmul.f32 %v264, %v264
    %v281 = vmul.f32 %v265, %v265
    %v282 = vmul.f32 %v266, %v266
    %v283 = vmul.f32 %v267, %v267
    %v284 = vmul.f32 %v268, %v268
    %v285 = vmul.f32 %v269, %v269
    %v286 = vmul.f32 %v270, %v270
    %v287 = vmul.f32 %v271, %v271
    %v288 = vmul.f32 %v272, %v272
    %v289 = vmul.f32 %v273, %v273
    %v290 = vmul.f32 %v274, %v274
    %v291 = vmul.f32 %v275, %v275
    %v292 = vmul.f32 %v276, %v276
    %v293 = vmul.f32 %v277, %v277
    %v294 = vmul.f32 %v278, %v278
    %v295 = vmul.f32 %v279, %v279
    %v296 = vadd.f32 %v280, %v281
    %v297 = vadd.f32 %v296, %v282
    %v298 = vadd.f32 %v297, %v283
    %v299 = vadd.f32 %v298, %v284
    %v300 = vadd.f32 %v299, %v285
    %v301 = vadd.f32 %v300, %v286
    %v302 = vadd.f32 %v301, %v287
    %v303 = vadd.f32 %v302, %v288
    %v304 = vadd.f32 %v303, %v289
    %v305 = vadd.f32 %v304, %v290
    %v306 = vadd.f32 %v305, %v291
    %v307 = vadd.f32 %v306, %v292
    %v308 = vadd.f32 %v307, %v293
    %v309 = vadd.f32 %v308, %v294
    %v310 = vadd.f32 %v309, %v295
    %311 = vadd.xlane.f32.xlu0 %v310
    %v312 = vpop.xlane.xlu0 %311
    %v313 = vrot.slane %v312, 4
    %v314 = vadd.f32 %v312, %v313
    %v315 = vrot.slane %v314, 2
    %v316 = vadd.f32 %v314, %v315
    %v317 = vrot.slane %v316, 1
    %v318 = vadd.f32 %v316, %v317
    %s319 = vtos %v318
    %v320 = vstv %s319
    %v321 = vadd.f32 %v320, 0.0
    %s322 = scalar_lea.vmem %s1, 64
    %v323 = vld [vmem:[%s322] sm:$0xff]
    %v324 = vld [vmem:[%s322 + $0x8] sm:$0xff]
    %v325 = vld [vmem:[%s322 + $0x10] sm:$0xff]
    %v326 = vld [vmem:[%s322 + $0x18] sm:$0xff]
    %v327 = vld [vmem:[%s322 + $0x20] sm:$0xff]
    %v328 = vld [vmem:[%s322 + $0x28] sm:$0xff]
    %v329 = vld [vmem:[%s322 + $0x30] sm:$0xff]
    %v330 = vld [vmem:[%s322 + $0x38] sm:$0xff]
    %v331 = vmul.f32 %v323, %v97
    %v332 = vmul.f32 %v324, %v97
    %v333 = vmul.f32 %v325, %v97
    %v334 = vmul.f32 %v326, %v97
    %v335 = vmul.f32 %v327, %v97
    %v336 = vmul.f32 %v328, %v97
    %v337 = vmul.f32 %v329, %v97
    %v338 = vmul.f32 %v330, %v97
    %v340 = vsel %vm107, %v331, 0
    %v343 = vsel %vm107, %v332, 0
    %v346 = vsel %vm107, %v333, 0
    %v349 = vsel %vm107, %v334, 0
    %v352 = vsel %vm107, %v335, 0
    %v355 = vsel %vm107, %v336, 0
    %v358 = vsel %vm107, %v337, 0
    %v361 = vsel %vm107, %v338, 0
    %363 = vmatprep.subr.mxu0 %v72
    %364 = vmatpush1.msra.mxu0 %v71
    %365 = vmatprep.subr.mxu0 %v74
    %366 = vmatpush1.msra.mxu0 %v73
    %367 = vmatprep.subr.mxu0 %v76
    %368 = vmatpush1.msra.mxu0 %v75
    %369 = vmatprep.subr.mxu0 %v78
    %370 = vmatpush1.msra.mxu0 %v77
    %371 = vmatprep.subr.mxu0 0.0
    %372 = vmatpush1.msra.mxu0 0.0
    %373 = vmatprep.subr.mxu0 0.0
    %374 = vmatpush1.msra.mxu0 0.0
    %375 = vmatprep.subr.mxu0 0.0
    %376 = vmatpush1.msra.mxu0 0.0
    %377 = vmatprep.subr.mxu0 0.0
    %378 = vmatpush1.msra.mxu0 0.0
    %379 = vmatprep.subr.mxu0 0.0
    %380 = vmatpush1.msra.mxu0 0.0
    %381 = vmatprep.subr.mxu0 0.0
    %382 = vmatpush1.msra.mxu0 0.0
    %383 = vmatprep.subr.mxu0 0.0
    %384 = vmatpush1.msra.mxu0 0.0
    %385 = vmatprep.subr.mxu0 0.0
    %386 = vmatpush1.msra.mxu0 0.0
    %387 = vmatprep.subr.mxu0 0.0
    %388 = vmatpush1.msra.mxu0 0.0
    %389 = vmatprep.subr.mxu0 0.0
    %390 = vmatpush1.msra.mxu0 0.0
    %391 = vmatprep.subr.mxu0 0.0
    %392 = vmatpush1.msra.mxu0 0.0
    %393 = vmatprep.subr.mxu0 0.0
    %394 = vmatpush1.msra.mxu0 0.0
    %395 = vmatprep.subr.mxu0 0.0
    %396 = vmatpush1.msra.mxu0 0.0
    %397 = vmatprep.subr.mxu0 0.0
    %398 = vmatpush1.msra.mxu0 0.0
    %399 = vmatprep.subr.mxu0 0.0
    %400 = vmatpush1.msra.mxu0 0.0
    %401 = vmatprep.subr.mxu0 0.0
    %402 = vmatpush1.msra.mxu0 0.0
    %403 = vmatprep.subr.mxu0 0.0
    %404 = vmatpush1.msra.mxu0 0.0
    %405 = vmatprep.subr.mxu0 0.0
    %406 = vmatpush1.msra.mxu0 0.0
    %407 = vmatprep.subr.mxu0 0.0
    %408 = vmatpush1.msra.mxu0 0.0
    %409 = vmatprep.subr.mxu0 0.0
    %410 = vmatpush1.msra.mxu0 0.0
    %411 = vmatprep.subr.mxu0 0.0
    %412 = vmatpush1.msra.mxu0 0.0
    %413 = vmatprep.subr.mxu0 0.0
    %414 = vmatpush1.msra.mxu0 0.0
    %415 = vmatprep.subr.mxu0 0.0
    %416 = vmatpush1.msra.mxu0 0.0
    %417 = vmatprep.subr.mxu0 0.0
    %418 = vmatpush1.msra.mxu0 0.0
    %419 = vmatprep.subr.mxu0 0.0
    %420 = vmatpush1.msra.mxu0 0.0
    %421 = vmatprep.subr.mxu0 0.0
    %422 = vmatpush1.msra.mxu0 0.0
    %423 = vmatprep.subr.mxu0 0.0
    %424 = vmatpush1.msra.mxu0 0.0
    %425 = vmatprep.subr.mxu0 0.0
    %426 = vmatpush1.msra.mxu0 0.0
    %427 = vmatprep.mubr.f32.mxu0 0.0
    %428 = vmatmul.mubr.f32.gmra.mrb[0].mxu0 %v340
    %v429 = vpop.f32.mrb[0].mxu0
    %v430 = vadd.f32 0.0, %v429
    %v431 = vpop.f32.mrb[0].mxu0
    %v432 = vadd.f32 0.0, %v431
    %433 = vmatprep.mubr.f32.mxu0 0.0
    %434 = vmatmul.mubr.f32.gmra.mrb[0].mxu0 %v343
    %v435 = vpop.f32.mrb[0].mxu0
    %v436 = vadd.f32 0.0, %v435
    %v437 = vpop.f32.mrb[0].mxu0
    %v438 = vadd.f32 0.0, %v437
    %439 = vmatprep.mubr.f32.mxu0 0.0
    %440 = vmatmul.mubr.f32.gmra.mrb[0].mxu0 %v346
    %v441 = vpop.f32.mrb[0].mxu0
    %v442 = vadd.f32 0.0, %v441
    %v443 = vpop.f32.mrb[0].mxu0
    %v444 = vadd.f32 0.0, %v443
    %445 = vmatprep.mubr.f32.mxu0 0.0
    %446 = vmatmul.mubr.f32.gmra.mrb[0].mxu0 %v349
    %v447 = vpop.f32.mrb[0].mxu0
    %v448 = vadd.f32 0.0, %v447
    %v449 = vpop.f32.mrb[0].mxu0
    %v450 = vadd.f32 0.0, %v449
    %451 = vmatprep.mubr.f32.mxu0 0.0
    %452 = vmatmul.mubr.f32.gmra.mrb[0].mxu0 %v352
    %v453 = vpop.f32.mrb[0].mxu0
    %v454 = vadd.f32 0.0, %v453
    %v455 = vpop.f32.mrb[0].mxu0
    %v456 = vadd.f32 0.0, %v455
    %457 = vmatprep.mubr.f32.mxu0 0.0
    %458 = vmatmul.mubr.f32.gmra.mrb[0].mxu0 %v355
    %v459 = vpop.f32.mrb[0].mxu0
    %v460 = vadd.f32 0.0, %v459
    %v461 = vpop.f32.mrb[0].mxu0
    %v462 = vadd.f32 0.0, %v461
    %463 = vmatprep.mubr.f32.mxu0 0.0
    %464 = vmatmul.mubr.f32.gmra.mrb[0].mxu0 %v358
    %v465 = vpop.f32.mrb[0].mxu0
    %v466 = vadd.f32 0.0, %v465
    %v467 = vpop.f32.mrb[0].mxu0
    %v468 = vadd.f32 0.0, %v467
    %469 = vmatprep.mubr.f32.mxu0 0.0
    %470 = vmatmul.mubr.f32.gmra.mrb[0].mxu0 %v361
    %v471 = vpop.f32.mrb[0].mxu0
    %v472 = vadd.f32 0.0, %v471
    %v473 = vpop.f32.mrb[0].mxu0
    %v474 = vadd.f32 0.0, %v473
    %475 = vdwg.mxu0
    %s476 = smul.u32 8, 2
    %s477 = smul.addr %s476, 8
    %s478 = scalar_lea.vmem [#allocation2], %s477
    %v479 = vld [vmem:[%s478] sm:$0xff]
    %v480 = vld [vmem:[%s478 + $0x8] sm:$0xff]
    %v481 = vld [vmem:[%s478 + $0x10] sm:$0xff]
    %v482 = vld [vmem:[%s478 + $0x18] sm:$0xff]
    %v483 = vld [vmem:[%s478 + $0x20] sm:$0xff]
    %v484 = vld [vmem:[%s478 + $0x28] sm:$0xff]
    %v485 = vld [vmem:[%s478 + $0x30] sm:$0xff]
    %v486 = vld [vmem:[%s478 + $0x38] sm:$0xff]
    %v487 = vld [vmem:[%s478 + $0x40] sm:$0xff]
    %v488 = vld [vmem:[%s478 + $0x48] sm:$0xff]
    %v489 = vld [vmem:[%s478 + $0x50] sm:$0xff]
    %v490 = vld [vmem:[%s478 + $0x58] sm:$0xff]
    %v491 = vld [vmem:[%s478 + $0x60] sm:$0xff]
    %v492 = vld [vmem:[%s478 + $0x68] sm:$0xff]
    %v493 = vld [vmem:[%s478 + $0x70] sm:$0xff]
    %v494 = vld [vmem:[%s478 + $0x78] sm:$0xff]
    %v495 = vsub.f32 %v479, %v430
    %v496 = vsub.f32 %v480, %v432
    %v497 = vsub.f32 %v481, %v436
    %v498 = vsub.f32 %v482, %v438
    %v499 = vsub.f32 %v483, %v442
    %v500 = vsub.f32 %v484, %v444
    %v501 = vsub.f32 %v485, %v448
    %v502 = vsub.f32 %v486, %v450
    %v503 = vsub.f32 %v487, %v454
    %v504 = vsub.f32 %v488, %v456
    %v505 = vsub.f32 %v489, %v460
    %v506 = vsub.f32 %v490, %v462
    %v507 = vsub.f32 %v491, %v466
    %v508 = vsub.f32 %v492, %v468
    %v509 = vsub.f32 %v493, %v472
    %v510 = vsub.f32 %v494, %v474
    %v511 = vmul.f32 %v495, %v495
    %v512 = vmul.f32 %v496, %v496
    %v513 = vmul.f32 %v497, %v497
    %v514 = vmul.f32 %v498, %v498
    %v515 = vmul.f32 %v499, %v499
    %v516 = vmul.f32 %v500, %v500
    %v517 = vmul.f32 %v501, %v501
    %v518 = vmul.f32 %v502, %v502
    %v519 = vmul.f32 %v503, %v503
    %v520 = vmul.f32 %v504, %v504
    %v521 = vmul.f32 %v505, %v505
    %v522 = vmul.f32 %v506, %v506
    %v523 = vmul.f32 %v507, %v507
    %v524 = vmul.f32 %v508, %v508
    %v525 = vmul.f32 %v509, %v509
    %v526 = vmul.f32 %v510, %v510
    %v527 = vadd.f32 %v511, %v512
    %v528 = vadd.f32 %v527, %v513
    %v529 = vadd.f32 %v528, %v514
    %v530 = vadd.f32 %v529, %v515
    %v531 = vadd.f32 %v530, %v516
    %v532 = vadd.f32 %v531, %v517
    %v533 = vadd.f32 %v532, %v518
    %v534 = vadd.f32 %v533, %v519
    %v535 = vadd.f32 %v534, %v520
    %v536 = vadd.f32 %v535, %v521
    %v537 = vadd.f32 %v536, %v522
    %v538 = vadd.f32 %v537, %v523
    %v539 = vadd.f32 %v538, %v524
    %v540 = vadd.f32 %v539, %v525
    %v541 = vadd.f32 %v540, %v526
    %542 = vadd.xlane.f32.xlu0 %v541
    %v543 = vpop.xlane.xlu0 %542
    %v544 = vrot.slane %v543, 4
    %v545 = vadd.f32 %v543, %v544
    %v546 = vrot.slane %v545, 2
    %v547 = vadd.f32 %v545, %v546
    %v548 = vrot.slane %v547, 1
    %v549 = vadd.f32 %v547, %v548
    %s550 = vtos %v549
    %v551 = vstv %s550
    %v552 = vadd.f32 %v321, %v551
    %s553 = scalar_lea.vmem %s1, 128
    %v554 = vld [vmem:[%s553] sm:$0xff]
    %v555 = vld [vmem:[%s553 + $0x8] sm:$0xff]
    %v556 = vld [vmem:[%s553 + $0x10] sm:$0xff]
    %v557 = vld [vmem:[%s553 + $0x18] sm:$0xff]
    %v558 = vld [vmem:[%s553 + $0x20] sm:$0xff]
    %v559 = vld [vmem:[%s553 + $0x28] sm:$0xff]
    %v560 = vld [vmem:[%s553 + $0x30] sm:$0xff]
    %v561 = vld [vmem:[%s553 + $0x38] sm:$0xff]
    %v562 = vmul.f32 %v554, %v97
    %v563 = vmul.f32 %v555, %v97
    %v564 = vmul.f32 %v556, %v97
    %v565 = vmul.f32 %v557, %v97
    %v566 = vmul.f32 %v558, %v97
    %v567 = vmul.f32 %v559, %v97
    %v568 = vmul.f32 %v560, %v97
    %v569 = vmul.f32 %v561, %v97
    %v571 = vsel %vm107, %v562, 0
    %v574 = vsel %vm107, %v563, 0
    %v577 = vsel %vm107, %v564, 0
    %v580 = vsel %vm107, %v565, 0
    %v583 = vsel %vm107, %v566, 0
    %v586 = vsel %vm107, %v567, 0
    %v589 = vsel %vm107, %v568, 0
    %v592 = vsel %vm107, %v569, 0
    %594 = vmatprep.subr.mxu0 %v72
    %595 = vmatpush1.msra.mxu0 %v71
    %596 = vmatprep.subr.mxu0 %v74
    %597 = vmatpush1.msra.mxu0 %v73
    %598 = vmatprep.subr.mxu0 %v76
    %599 = vmatpush1.msra.mxu0 %v75
    %600 = vmatprep.subr.mxu0 %v78
    %601 = vmatpush1.msra.mxu0 %v77
    %602 = vmatprep.subr.mxu0 0.0
    %603 = vmatpush1.msra.mxu0 0.0
    %604 = vmatprep.subr.mxu0 0.0
    %605 = vmatpush1.msra.mxu0 0.0
    %606 = vmatprep.subr.mxu0 0.0
    %607 = vmatpush1.msra.mxu0 0.0
    %608 = vmatprep.subr.mxu0 0.0
    %609 = vmatpush1.msra.mxu0 0.0
    %610 = vmatprep.subr.mxu0 0.0
    %611 = vmatpush1.msra.mxu0 0.0
    %612 = vmatprep.subr.mxu0 0.0
    %613 = vmatpush1.msra.mxu0 0.0
    %614 = vmatprep.subr.mxu0 0.0
    %615 = vmatpush1.msra.mxu0 0.0
    %616 = vmatprep.subr.mxu0 0.0
    %617 = vmatpush1.msra.mxu0 0.0
    %618 = vmatprep.subr.mxu0 0.0
    %619 = vmatpush1.msra.mxu0 0.0
    %620 = vmatprep.subr.mxu0 0.0
    %621 = vmatpush1.msra.mxu0 0.0
    %622 = vmatprep.subr.mxu0 0.0
    %623 = vmatpush1.msra.mxu0 0.0
    %624 = vmatprep.subr.mxu0 0.0
    %625 = vmatpush1.msra.mxu0 0.0
    %626 = vmatprep.subr.mxu0 0.0
    %627 = vmatpush1.msra.mxu0 0.0
    %628 = vmatprep.subr.mxu0 0.0
    %629 = vmatpush1.msra.mxu0 0.0
    %630 = vmatprep.subr.mxu0 0.0
    %631 = vmatpush1.msra.mxu0 0.0
    %632 = vmatprep.subr.mxu0 0.0
    %633 = vmatpush1.msra.mxu0 0.0
    %634 = vmatprep.subr.mxu0 0.0
    %635 = vmatpush1.msra.mxu0 0.0
    %636 = vmatprep.subr.mxu0 0.0
    %637 = vmatpush1.msra.mxu0 0.0
    %638 = vmatprep.subr.mxu0 0.0
    %639 = vmatpush1.msra.mxu0 0.0
    %640 = vmatprep.subr.mxu0 0.0
    %641 = vmatpush1.msra.mxu0 0.0
    %642 = vmatprep.subr.mxu0 0.0
    %643 = vmatpush1.msra.mxu0 0.0
    %644 = vmatprep.subr.mxu0 0.0
    %645 = vmatpush1.msra.mxu0 0.0
    %646 = vmatprep.subr.mxu0 0.0
    %647 = vmatpush1.msra.mxu0 0.0
    %648 = vmatprep.subr.mxu0 0.0
    %649 = vmatpush1.msra.mxu0 0.0
    %650 = vmatprep.subr.mxu0 0.0
    %651 = vmatpush1.msra.mxu0 0.0
    %652 = vmatprep.subr.mxu0 0.0
    %653 = vmatpush1.msra.mxu0 0.0
    %654 = vmatprep.subr.mxu0 0.0
    %655 = vmatpush1.msra.mxu0 0.0
    %656 = vmatprep.subr.mxu0 0.0
    %657 = vmatpush1.msra.mxu0 0.0
    %658 = vmatprep.mubr.f32.mxu0 0.0
    %659 = vmatmul.mubr.f32.gmra.mrb[0].mxu0 %v571
    %v660 = vpop.f32.mrb[0].mxu0
    %v661 = vadd.f32 0.0, %v660
    %v662 = vpop.f32.mrb[0].mxu0
    %v663 = vadd.f32 0.0, %v662
    %664 = vmatprep.mubr.f32.mxu0 0.0
    %665 = vmatmul.mubr.f32.gmra.mrb[0].mxu0 %v574
    %v666 = vpop.f32.mrb[0].mxu0
    %v667 = vadd.f32 0.0, %v666
    %v668 = vpop.f32.mrb[0].mxu0
    %v669 = vadd.f32 0.0, %v668
    %670 = vmatprep.mubr.f32.mxu0 0.0
    %671 = vmatmul.mubr.f32.gmra.mrb[0].mxu0 %v577
    %v672 = vpop.f32.mrb[0].mxu0
    %v673 = vadd.f32 0.0, %v672
    %v674 = vpop.f32.mrb[0].mxu0
    %v675 = vadd.f32 0.0, %v674
    %676 = vmatprep.mubr.f32.mxu0 0.0
    %677 = vmatmul.mubr.f32.gmra.mrb[0].mxu0 %v580
    %v678 = vpop.f32.mrb[0].mxu0
    %v679 = vadd.f32 0.0, %v678
    %v680 = vpop.f32.mrb[0].mxu0
    %v681 = vadd.f32 0.0, %v680
    %682 = vmatprep.mubr.f32.mxu0 0.0
    %683 = vmatmul.mubr.f32.gmra.mrb[0].mxu0 %v583
    %v684 = vpop.f32.mrb[0].mxu0
    %v685 = vadd.f32 0.0, %v684
    %v686 = vpop.f32.mrb[0].mxu0
    %v687 = vadd.f32 0.0, %v686
    %688 = vmatprep.mubr.f32.mxu0 0.0
    %689 = vmatmul.mubr.f32.gmra.mrb[0].mxu0 %v586
    %v690 = vpop.f32.mrb[0].mxu0
    %v691 = vadd.f32 0.0, %v690
    %v692 = vpop.f32.mrb[0].mxu0
    %v693 = vadd.f32 0.0, %v692
    %694 = vmatprep.mubr.f32.mxu0 0.0
    %695 = vmatmul.mubr.f32.gmra.mrb[0].mxu0 %v589
    %v696 = vpop.f32.mrb[0].mxu0
    %v697 = vadd.f32 0.0, %v696
    %v698 = vpop.f32.mrb[0].mxu0
    %v699 = vadd.f32 0.0, %v698
    %700 = vmatprep.mubr.f32.mxu0 0.0
    %701 = vmatmul.mubr.f32.gmra.mrb[0].mxu0 %v592
    %v702 = vpop.f32.mrb[0].mxu0
    %v703 = vadd.f32 0.0, %v702
    %v704 = vpop.f32.mrb[0].mxu0
    %v705 = vadd.f32 0.0, %v704
    %706 = vdwg.mxu0
    %s707 = smul.u32 16, 2
    %s708 = smul.addr %s707, 8
    %s709 = scalar_lea.vmem [#allocation2], %s708
    %v710 = vld [vmem:[%s709] sm:$0xff]
    %v711 = vld [vmem:[%s709 + $0x8] sm:$0xff]
    %v712 = vld [vmem:[%s709 + $0x10] sm:$0xff]
    %v713 = vld [vmem:[%s709 + $0x18] sm:$0xff]
    %v714 = vld [vmem:[%s709 + $0x20] sm:$0xff]
    %v715 = vld [vmem:[%s709 + $0x28] sm:$0xff]
    %v716 = vld [vmem:[%s709 + $0x30] sm:$0xff]
    %v717 = vld [vmem:[%s709 + $0x38] sm:$0xff]
    %v718 = vld [vmem:[%s709 + $0x40] sm:$0xff]
    %v719 = vld [vmem:[%s709 + $0x48] sm:$0xff]
    %v720 = vld [vmem:[%s709 + $0x50] sm:$0xff]
    %v721 = vld [vmem:[%s709 + $0x58] sm:$0xff]
    %v722 = vld [vmem:[%s709 + $0x60] sm:$0xff]
    %v723 = vld [vmem:[%s709 + $0x68] sm:$0xff]
    %v724 = vld [vmem:[%s709 + $0x70] sm:$0xff]
    %v725 = vld [vmem:[%s709 + $0x78] sm:$0xff]
    %v726 = vsub.f32 %v710, %v661
    %v727 = vsub.f32 %v711, %v663
    %v728 = vsub.f32 %v712, %v667
    %v729 = vsub.f32 %v713, %v669
    %v730 = vsub.f32 %v714, %v673
    %v731 = vsub.f32 %v715, %v675
    %v732 = vsub.f32 %v716, %v679
    %v733 = vsub.f32 %v717, %v681
    %v734 = vsub.f32 %v718, %v685
    %v735 = vsub.f32 %v719, %v687
    %v736 = vsub.f32 %v720, %v691
    %v737 = vsub.f32 %v721, %v693
    %v738 = vsub.f32 %v722, %v697
    %v739 = vsub.f32 %v723, %v699
    %v740 = vsub.f32 %v724, %v703
    %v741 = vsub.f32 %v725, %v705
    %v742 = vmul.f32 %v726, %v726
    %v743 = vmul.f32 %v727, %v727
    %v744 = vmul.f32 %v728, %v728
    %v745 = vmul.f32 %v729, %v729
    %v746 = vmul.f32 %v730, %v730
    %v747 = vmul.f32 %v731, %v731
    %v748 = vmul.f32 %v732, %v732
    %v749 = vmul.f32 %v733, %v733
    %v750 = vmul.f32 %v734, %v734
    %v751 = vmul.f32 %v735, %v735
    %v752 = vmul.f32 %v736, %v736
    %v753 = vmul.f32 %v737, %v737
    %v754 = vmul.f32 %v738, %v738
    %v755 = vmul.f32 %v739, %v739
    %v756 = vmul.f32 %v740, %v740
    %v757 = vmul.f32 %v741, %v741
    %v758 = vadd.f32 %v742, %v743
    %v759 = vadd.f32 %v758, %v744
    %v760 = vadd.f32 %v759, %v745
    %v761 = vadd.f32 %v760, %v746
    %v762 = vadd.f32 %v761, %v747
    %v763 = vadd.f32 %v762, %v748
    %v764 = vadd.f32 %v763, %v749
    %v765 = vadd.f32 %v764, %v750
    %v766 = vadd.f32 %v765, %v751
    %v767 = vadd.f32 %v766, %v752
    %v768 = vadd.f32 %v767, %v753
    %v769 = vadd.f32 %v768, %v754
    %v770 = vadd.f32 %v769, %v755
    %v771 = vadd.f32 %v770, %v756
    %v772 = vadd.f32 %v771, %v757
    %773 = vadd.xlane.f32.xlu0 %v772
    %v774 = vpop.xlane.xlu0 %773
    %v775 = vrot.slane %v774, 4
    %v776 = vadd.f32 %v774, %v775
    %v777 = vrot.slane %v776, 2
    %v778 = vadd.f32 %v776, %v777
    %v779 = vrot.slane %v778, 1
    %v780 = vadd.f32 %v778, %v779
    %s781 = vtos %v780
    %v782 = vstv %s781
    %v783 = vadd.f32 %v552, %v782
    %s784 = scalar_lea.vmem %s1, 192
    %v785 = vld [vmem:[%s784] sm:$0xff]
    %v786 = vld [vmem:[%s784 + $0x8] sm:$0xff]
    %v787 = vld [vmem:[%s784 + $0x10] sm:$0xff]
    %v788 = vld [vmem:[%s784 + $0x18] sm:$0xff]
    %v789 = vld [vmem:[%s784 + $0x20] sm:$0xff]
    %v790 = vld [vmem:[%s784 + $0x28] sm:$0xff]
    %v791 = vld [vmem:[%s784 + $0x30] sm:$0xff]
    %v792 = vld [vmem:[%s784 + $0x38] sm:$0xff]
    %v793 = vmul.f32 %v785, %v97
    %v794 = vmul.f32 %v786, %v97
    %v795 = vmul.f32 %v787, %v97
    %v796 = vmul.f32 %v788, %v97
    %v797 = vmul.f32 %v789, %v97
    %v798 = vmul.f32 %v790, %v97
    %v799 = vmul.f32 %v791, %v97
    %v800 = vmul.f32 %v792, %v97
    %v802 = vsel %vm107, %v793, 0
    %v805 = vsel %vm107, %v794, 0
    %v808 = vsel %vm107, %v795, 0
    %v811 = vsel %vm107, %v796, 0
    %v814 = vsel %vm107, %v797, 0
    %v817 = vsel %vm107, %v798, 0
    %v820 = vsel %vm107, %v799, 0
    %v823 = vsel %vm107, %v800, 0
    %825 = vmatprep.subr.mxu0 %v72
    %826 = vmatpush1.msra.mxu0 %v71
    %827 = vmatprep.subr.mxu0 %v74
    %828 = vmatpush1.msra.mxu0 %v73
    %829 = vmatprep.subr.mxu0 %v76
    %830 = vmatpush1.msra.mxu0 %v75
    %831 = vmatprep.subr.mxu0 %v78
    %832 = vmatpush1.msra.mxu0 %v77
    %833 = vmatprep.subr.mxu0 0.0
    %834 = vmatpush1.msra.mxu0 0.0
    %835 = vmatprep.subr.mxu0 0.0
    %836 = vmatpush1.msra.mxu0 0.0
    %837 = vmatprep.subr.mxu0 0.0
    %838 = vmatpush1.msra.mxu0 0.0
    %839 = vmatprep.subr.mxu0 0.0
    %840 = vmatpush1.msra.mxu0 0.0
    %841 = vmatprep.subr.mxu0 0.0
    %842 = vmatpush1.msra.mxu0 0.0
    %843 = vmatprep.subr.mxu0 0.0
    %844 = vmatpush1.msra.mxu0 0.0
    %845 = vmatprep.subr.mxu0 0.0
    %846 = vmatpush1.msra.mxu0 0.0
    %847 = vmatprep.subr.mxu0 0.0
    %848 = vmatpush1.msra.mxu0 0.0
    %849 = vmatprep.subr.mxu0 0.0
    %850 = vmatpush1.msra.mxu0 0.0
    %851 = vmatprep.subr.mxu0 0.0
    %852 = vmatpush1.msra.mxu0 0.0
    %853 = vmatprep.subr.mxu0 0.0
    %854 = vmatpush1.msra.mxu0 0.0
    %855 = vmatprep.subr.mxu0 0.0
    %856 = vmatpush1.msra.mxu0 0.0
    %857 = vmatprep.subr.mxu0 0.0
    %858 = vmatpush1.msra.mxu0 0.0
    %859 = vmatprep.subr.mxu0 0.0
    %860 = vmatpush1.msra.mxu0 0.0
    %861 = vmatprep.subr.mxu0 0.0
    %862 = vmatpush1.msra.mxu0 0.0
    %863 = vmatprep.subr.mxu0 0.0
    %864 = vmatpush1.msra.mxu0 0.0
    %865 = vmatprep.subr.mxu0 0.0
    %866 = vmatpush1.msra.mxu0 0.0
    %867 = vmatprep.subr.mxu0 0.0
    %868 = vmatpush1.msra.mxu0 0.0
    %869 = vmatprep.subr.mxu0 0.0
    %870 = vmatpush1.msra.mxu0 0.0
    %871 = vmatprep.subr.mxu0 0.0
    %872 = vmatpush1.msra.mxu0 0.0
    %873 = vmatprep.subr.mxu0 0.0
    %874 = vmatpush1.msra.mxu0 0.0
    %875 = vmatprep.subr.mxu0 0.0
    %876 = vmatpush1.msra.mxu0 0.0
    %877 = vmatprep.subr.mxu0 0.0
    %878 = vmatpush1.msra.mxu0 0.0
    %879 = vmatprep.subr.mxu0 0.0
    %880 = vmatpush1.msra.mxu0 0.0
    %881 = vmatprep.subr.mxu0 0.0
    %882 = vmatpush1.msra.mxu0 0.0
    %883 = vmatprep.subr.mxu0 0.0
    %884 = vmatpush1.msra.mxu0 0.0
    %885 = vmatprep.subr.mxu0 0.0
    %886 = vmatpush1.msra.mxu0 0.0
    %887 = vmatprep.subr.mxu0 0.0
    %888 = vmatpush1.msra.mxu0 0.0
    %889 = vmatprep.mubr.f32.mxu0 0.0
    %890 = vmatmul.mubr.f32.gmra.mrb[0].mxu0 %v802
    %v891 = vpop.f32.mrb[0].mxu0
    %v892 = vadd.f32 0.0, %v891
    %v893 = vpop.f32.mrb[0].mxu0
    %v894 = vadd.f32 0.0, %v893
    %895 = vmatprep.mubr.f32.mxu0 0.0
    %896 = vmatmul.mubr.f32.gmra.mrb[0].mxu0 %v805
    %v897 = vpop.f32.mrb[0].mxu0
    %v898 = vadd.f32 0.0, %v897
    %v899 = vpop.f32.mrb[0].mxu0
    %v900 = vadd.f32 0.0, %v899
    %901 = vmatprep.mubr.f32.mxu0 0.0
    %902 = vmatmul.mubr.f32.gmra.mrb[0].mxu0 %v808
    %v903 = vpop.f32.mrb[0].mxu0
    %v904 = vadd.f32 0.0, %v903
    %v905 = vpop.f32.mrb[0].mxu0
    %v906 = vadd.f32 0.0, %v905
    %907 = vmatprep.mubr.f32.mxu0 0.0
    %908 = vmatmul.mubr.f32.gmra.mrb[0].mxu0 %v811
    %v909 = vpop.f32.mrb[0].mxu0
    %v910 = vadd.f32 0.0, %v909
    %v911 = vpop.f32.mrb[0].mxu0
    %v912 = vadd.f32 0.0, %v911
    %913 = vmatprep.mubr.f32.mxu0 0.0
    %914 = vmatmul.mubr.f32.gmra.mrb[0].mxu0 %v814
    %v915 = vpop.f32.mrb[0].mxu0
    %v916 = vadd.f32 0.0, %v915
    %v917 = vpop.f32.mrb[0].mxu0
    %v918 = vadd.f32 0.0, %v917
    %919 = vmatprep.mubr.f32.mxu0 0.0
    %920 = vmatmul.mubr.f32.gmra.mrb[0].mxu0 %v817
    %v921 = vpop.f32.mrb[0].mxu0
    %v922 = vadd.f32 0.0, %v921
    %v923 = vpop.f32.mrb[0].mxu0
    %v924 = vadd.f32 0.0, %v923
    %925 = vmatprep.mubr.f32.mxu0 0.0
    %926 = vmatmul.mubr.f32.gmra.mrb[0].mxu0 %v820
    %v927 = vpop.f32.mrb[0].mxu0
    %v928 = vadd.f32 0.0, %v927
    %v929 = vpop.f32.mrb[0].mxu0
    %v930 = vadd.f32 0.0, %v929
    %931 = vmatprep.mubr.f32.mxu0 0.0
    %932 = vmatmul.mubr.f32.gmra.mrb[0].mxu0 %v823
    %v933 = vpop.f32.mrb[0].mxu0
    %v934 = vadd.f32 0.0, %v933
    %v935 = vpop.f32.mrb[0].mxu0
    %v936 = vadd.f32 0.0, %v935
    %937 = vdwg.mxu0
    %s938 = smul.u32 24, 2
    %s939 = smul.addr %s938, 8
    %s940 = scalar_lea.vmem [#allocation2], %s939
    %v941 = vld [vmem:[%s940] sm:$0xff]
    %v942 = vld [vmem:[%s940 + $0x8] sm:$0xff]
    %v943 = vld [vmem:[%s940 + $0x10] sm:$0xff]
    %v944 = vld [vmem:[%s940 + $0x18] sm:$0xff]
    %v945 = vld [vmem:[%s940 + $0x20] sm:$0xff]
    %v946 = vld [vmem:[%s940 + $0x28] sm:$0xff]
    %v947 = vld [vmem:[%s940 + $0x30] sm:$0xff]
    %v948 = vld [vmem:[%s940 + $0x38] sm:$0xff]
    %v949 = vld [vmem:[%s940 + $0x40] sm:$0xff]
    %v950 = vld [vmem:[%s940 + $0x48] sm:$0xff]
    %v951 = vld [vmem:[%s940 + $0x50] sm:$0xff]
    %v952 = vld [vmem:[%s940 + $0x58] sm:$0xff]
    %v953 = vld [vmem:[%s940 + $0x60] sm:$0xff]
    %v954 = vld [vmem:[%s940 + $0x68] sm:$0xff]
    %v955 = vld [vmem:[%s940 + $0x70] sm:$0xff]
    %v956 = vld [vmem:[%s940 + $0x78] sm:$0xff]
    %v957 = vsub.f32 %v941, %v892
    %v958 = vsub.f32 %v942, %v894
    %v959 = vsub.f32 %v943, %v898
    %v960 = vsub.f32 %v944, %v900
    %v961 = vsub.f32 %v945, %v904
    %v962 = vsub.f32 %v946, %v906
    %v963 = vsub.f32 %v947, %v910
    %v964 = vsub.f32 %v948, %v912
    %v965 = vsub.f32 %v949, %v916
    %v966 = vsub.f32 %v950, %v918
    %v967 = vsub.f32 %v951, %v922
    %v968 = vsub.f32 %v952, %v924
    %v969 = vsub.f32 %v953, %v928
    %v970 = vsub.f32 %v954, %v930
    %v971 = vsub.f32 %v955, %v934
    %v972 = vsub.f32 %v956, %v936
    %v973 = vmul.f32 %v957, %v957
    %v974 = vmul.f32 %v958, %v958
    %v975 = vmul.f32 %v959, %v959
    %v976 = vmul.f32 %v960, %v960
    %v977 = vmul.f32 %v961, %v961
    %v978 = vmul.f32 %v962, %v962
    %v979 = vmul.f32 %v963, %v963
    %v980 = vmul.f32 %v964, %v964
    %v981 = vmul.f32 %v965, %v965
    %v982 = vmul.f32 %v966, %v966
    %v983 = vmul.f32 %v967, %v967
    %v984 = vmul.f32 %v968, %v968
    %v985 = vmul.f32 %v969, %v969
    %v986 = vmul.f32 %v970, %v970
    %v987 = vmul.f32 %v971, %v971
    %v988 = vmul.f32 %v972, %v972
    %v989 = vadd.f32 %v973, %v974
    %v990 = vadd.f32 %v989, %v975
    %v991 = vadd.f32 %v990, %v976
    %v992 = vadd.f32 %v991, %v977
    %v993 = vadd.f32 %v992, %v978
    %v994 = vadd.f32 %v993, %v979
    %v995 = vadd.f32 %v994, %v980
    %v996 = vadd.f32 %v995, %v981
    %v997 = vadd.f32 %v996, %v982
    %v998 = vadd.f32 %v997, %v983
    %v999 = vadd.f32 %v998, %v984
    %v1000 = vadd.f32 %v999, %v985
    %v1001 = vadd.f32 %v1000, %v986
    %v1002 = vadd.f32 %v1001, %v987
    %v1003 = vadd.f32 %v1002, %v988
    %1004 = vadd.xlane.f32.xlu0 %v1003
    %v1005 = vpop.xlane.xlu0 %1004
    %v1006 = vrot.slane %v1005, 4
    %v1007 = vadd.f32 %v1005, %v1006
    %v1008 = vrot.slane %v1007, 2
    %v1009 = vadd.f32 %v1007, %v1008
    %v1010 = vrot.slane %v1009, 1
    %v1011 = vadd.f32 %v1009, %v1010
    %s1012 = vtos %v1011
    %v1013 = vstv %s1012
    %v1014 = vadd.f32 %v783, %v1013
    %v1015 = vmul.f32 %v1014, 1.5258789e-05
    %v1016 = vlaneseq
    %v1017 = vshrl.u32 %v1016, 7
    %v1018 = vadd.s32 %v1017, 8
    %v1019 = vadd.s32 %v1017, 16
    %v1020 = vadd.s32 %v1017, 24
    %v1021 = vlaneseq
    %v1022 = vand.u32 %v1021, 127
    %vm1023 = vcmp.eq.s32.totalorder %v1017, %v1022
    %vm1024 = vcmp.eq.s32.totalorder %v1018, %v1022
    %vm1025 = vcmp.eq.s32.totalorder %v1019, %v1022
    %vm1026 = vcmp.eq.s32.totalorder %v1020, %v1022
    %v1027 = vsel %vm1023, 1, 0
    %v1028 = vsel %vm1024, 1, 0
    %v1029 = vsel %vm1025, 1, 0
    %v1030 = vsel %vm1026, 1, 0
    %v1031 = vcvt.s32.f32 %v1027
    %v1032 = vcvt.s32.f32 %v1028
    %v1033 = vcvt.s32.f32 %v1029
    %v1034 = vcvt.s32.f32 %v1030
    %1035 = vxpose.xlu0.b32.start [1/16] %v39, 128
    %1036 = vxpose.xlu0.b32.cont [2/16] %v40, 128
    %1037 = vxpose.xlu0.b32.cont [3/16] %v41, 128
    %1038 = vxpose.xlu0.b32.cont [4/16] %v42, 128
    %1039 = vxpose.xlu0.b32.cont [5/16] %v43, 128
    %1040 = vxpose.xlu0.b32.cont [6/16] %v44, 128
    %1041 = vxpose.xlu0.b32.cont [7/16] %v45, 128
    %1042 = vxpose.xlu0.b32.cont [8/16] %v46, 128
    %1043 = vxpose.xlu0.b32.cont [9/16] %v47, 128
    %1044 = vxpose.xlu0.b32.cont [10/16] %v48, 128
    %1045 = vxpose.xlu0.b32.cont [11/16] %v49, 128
    %1046 = vxpose.xlu0.b32.cont [12/16] %v50, 128
    %1047 = vxpose.xlu0.b32.cont [13/16] %v51, 128
    %1048 = vxpose.xlu0.b32.cont [14/16] %v52, 128
    %1049 = vxpose.xlu0.b32.cont [15/16] %v53, 128
    %1050 = vxpose.xlu0.b32.end [16/16] %v54, 128
    %v1051 = vpop.trf.xlu0
    %v1052 = vpop.trf.xlu0
    %v1053 = vpop.trf.xlu0
    %v1054 = vpop.trf.xlu0
    %v1055 = vpop.trf.xlu0
    %v1056 = vpop.trf.xlu0
    %v1057 = vpop.trf.xlu0
    %v1058 = vpop.trf.xlu0
    %v1059 = vpop.trf.xlu0
    %v1060 = vpop.trf.xlu0
    %v1061 = vpop.trf.xlu0
    %v1062 = vpop.trf.xlu0
    %v1063 = vpop.trf.xlu0
    %v1064 = vpop.trf.xlu0
    %v1065 = vpop.trf.xlu0
    %v1066 = vpop.trf.xlu0
    %1067 = vxpose.xlu0.b32.start [1/16] %v55, 128
    %1068 = vxpose.xlu0.b32.cont [2/16] %v56, 128
    %1069 = vxpose.xlu0.b32.cont [3/16] %v57, 128
    %1070 = vxpose.xlu0.b32.cont [4/16] %v58, 128
    %1071 = vxpose.xlu0.b32.cont [5/16] %v59, 128
    %1072 = vxpose.xlu0.b32.cont [6/16] %v60, 128
    %1073 = vxpose.xlu0.b32.cont [7/16] %v61, 128
    %1074 = vxpose.xlu0.b32.cont [8/16] %v62, 128
    %1075 = vxpose.xlu0.b32.cont [9/16] %v63, 128
    %1076 = vxpose.xlu0.b32.cont [10/16] %v64, 128
    %1077 = vxpose.xlu0.b32.cont [11/16] %v65, 128
    %1078 = vxpose.xlu0.b32.cont [12/16] %v66, 128
    %1079 = vxpose.xlu0.b32.cont [13/16] %v67, 128
    %1080 = vxpose.xlu0.b32.cont [14/16] %v68, 128
    %1081 = vxpose.xlu0.b32.cont [15/16] %v69, 128
    %1082 = vxpose.xlu0.b32.end [16/16] %v70, 128
    %v1083 = vpop.trf.xlu0
    %v1084 = vpop.trf.xlu0
    %v1085 = vpop.trf.xlu0
    %v1086 = vpop.trf.xlu0
    %v1087 = vpop.trf.xlu0
    %v1088 = vpop.trf.xlu0
    %v1089 = vpop.trf.xlu0
    %v1090 = vpop.trf.xlu0
    %v1091 = vpop.trf.xlu0
    %v1092 = vpop.trf.xlu0
    %v1093 = vpop.trf.xlu0
    %v1094 = vpop.trf.xlu0
    %v1095 = vpop.trf.xlu0
    %v1096 = vpop.trf.xlu0
    %v1097 = vpop.trf.xlu0
    %v1098 = vpop.trf.xlu0
    %1099 = vmatprep.subr.mxu0 0.0
    %1100 = vmatpush1.msra.mxu0 %v39
    %1101 = vmatprep.subr.mxu0 0.0
    %1102 = vmatpush1.msra.mxu0 %v40
    %1103 = vmatprep.subr.mxu0 0.0
    %1104 = vmatpush1.msra.mxu0 %v41
    %1105 = vmatprep.subr.mxu0 0.0
    %1106 = vmatpush1.msra.mxu0 %v42
    %1107 = vmatprep.subr.mxu0 0.0
    %1108 = vmatpush1.msra.mxu0 %v43
    %1109 = vmatprep.subr.mxu0 0.0
    %1110 = vmatpush1.msra.mxu0 %v44
    %1111 = vmatprep.subr.mxu0 0.0
    %1112 = vmatpush1.msra.mxu0 %v45
    %1113 = vmatprep.subr.mxu0 0.0
    %1114 = vmatpush1.msra.mxu0 %v46
    %1115 = vmatprep.subr.mxu0 0.0
    %1116 = vmatpush1.msra.mxu0 %v47
    %1117 = vmatprep.subr.mxu0 0.0
    %1118 = vmatpush1.msra.mxu0 %v48
    %1119 = vmatprep.subr.mxu0 0.0
    %1120 = vmatpush1.msra.mxu0 %v49
    %1121 = vmatprep.subr.mxu0 0.0
    %1122 = vmatpush1.msra.mxu0 %v50
    %1123 = vmatprep.subr.mxu0 0.0
    %1124 = vmatpush1.msra.mxu0 %v51
    %1125 = vmatprep.subr.mxu0 0.0
    %1126 = vmatpush1.msra.mxu0 %v52
    %1127 = vmatprep.subr.mxu0 0.0
    %1128 = vmatpush1.msra.mxu0 %v53
    %1129 = vmatprep.subr.mxu0 0.0
    %1130 = vmatpush1.msra.mxu0 %v54
    %1131 = vmatprep.subr.mxu0 0.0
    %1132 = vmatpush1.msra.mxu0 %v55
    %1133 = vmatprep.subr.mxu0 0.0
    %1134 = vmatpush1.msra.mxu0 %v56
    %1135 = vmatprep.subr.mxu0 0.0
    %1136 = vmatpush1.msra.mxu0 %v57
    %1137 = vmatprep.subr.mxu0 0.0
    %1138 = vmatpush1.msra.mxu0 %v58
    %1139 = vmatprep.subr.mxu0 0.0
    %1140 = vmatpush1.msra.mxu0 %v59
    %1141 = vmatprep.subr.mxu0 0.0
    %1142 = vmatpush1.msra.mxu0 %v60
    %1143 = vmatprep.subr.mxu0 0.0
    %1144 = vmatpush1.msra.mxu0 %v61
    %1145 = vmatprep.subr.mxu0 0.0
    %1146 = vmatpush1.msra.mxu0 %v62
    %1147 = vmatprep.subr.mxu0 0.0
    %1148 = vmatpush1.msra.mxu0 %v63
    %1149 = vmatprep.subr.mxu0 0.0
    %1150 = vmatpush1.msra.mxu0 %v64
    %1151 = vmatprep.subr.mxu0 0.0
    %1152 = vmatpush1.msra.mxu0 %v65
    %1153 = vmatprep.subr.mxu0 0.0
    %1154 = vmatpush1.msra.mxu0 %v66
    %1155 = vmatprep.subr.mxu0 0.0
    %1156 = vmatpush1.msra.mxu0 %v67
    %1157 = vmatprep.subr.mxu0 0.0
    %1158 = vmatpush1.msra.mxu0 %v68
    %1159 = vmatprep.subr.mxu0 0.0
    %1160 = vmatpush1.msra.mxu0 %v69
    %1161 = vmatprep.subr.mxu0 0.0
    %1162 = vmatpush1.msra.mxu0 %v70
    %1163 = vmatprep.mubr.f32.mxu0 %v1083
    %1164 = vmatmul.mubr.f32.gmra.mrb[0].mxu0 %v1051
    %v1165 = vpop.f32.mrb[0].mxu0
    %v1166 = vadd.f32 0.0, %v1165
    %v1167 = vpop.f32.mrb[0].mxu0
    %1168 = vmatprep.mubr.f32.mxu0 %v1084
    %1169 = vmatmul.mubr.f32.gmra.mrb[0].mxu0 %v1052
    %v1170 = vpop.f32.mrb[0].mxu0
    %v1171 = vadd.f32 0.0, %v1170
    %v1172 = vpop.f32.mrb[0].mxu0
    %1173 = vmatprep.mubr.f32.mxu0 %v1085
    %1174 = vmatmul.mubr.f32.gmra.mrb[0].mxu0 %v1053
    %v1175 = vpop.f32.mrb[0].mxu0
    %v1176 = vadd.f32 0.0, %v1175
    %v1177 = vpop.f32.mrb[0].mxu0
    %1178 = vmatprep.mubr.f32.mxu0 %v1086
    %1179 = vmatmul.mubr.f32.gmra.mrb[0].mxu0 %v1054
    %v1180 = vpop.f32.mrb[0].mxu0
    %v1181 = vadd.f32 0.0, %v1180
    %v1182 = vpop.f32.mrb[0].mxu0
    %1183 = vdwg.mxu0
    %v1184 = vsub.f32 %v1166, %v1031
    %v1185 = vsub.f32 %v1171, %v1032
    %v1186 = vsub.f32 %v1176, %v1033
    %v1187 = vsub.f32 %v1181, %v1034
    %1188 = vmatprep.subr.mxu0 %v72
    %1189 = vmatpush1.xpose.msra.mxu0 %v71
    %1190 = vmatprep.subr.mxu0 %v74
    %1191 = vmatpush1.xpose.msra.mxu0 %v73
    %1192 = vmatprep.subr.mxu0 %v76
    %1193 = vmatpush1.xpose.msra.mxu0 %v75
    %1194 = vmatprep.subr.mxu0 %v78
    %1195 = vmatpush1.xpose.msra.mxu0 %v77
    %1196 = vmatprep.subr.mxu0 0.0
    %1197 = vmatpush1.xpose.msra.mxu0 0.0
    %1198 = vmatprep.subr.mxu0 0.0
    %1199 = vmatpush1.xpose.msra.mxu0 0.0
    %1200 = vmatprep.subr.mxu0 0.0
    %1201 = vmatpush1.xpose.msra.mxu0 0.0
    %1202 = vmatprep.subr.mxu0 0.0
    %1203 = vmatpush1.xpose.msra.mxu0 0.0
    %1204 = vmatprep.subr.mxu0 0.0
    %1205 = vmatpush1.xpose.msra.mxu0 0.0
    %1206 = vmatprep.subr.mxu0 0.0
    %1207 = vmatpush1.xpose.msra.mxu0 0.0
    %1208 = vmatprep.subr.mxu0 0.0
    %1209 = vmatpush1.xpose.msra.mxu0 0.0
    %1210 = vmatprep.subr.mxu0 0.0
    %1211 = vmatpush1.xpose.msra.mxu0 0.0
    %1212 = vmatprep.subr.mxu0 0.0
    %1213 = vmatpush1.xpose.msra.mxu0 0.0
    %1214 = vmatprep.subr.mxu0 0.0
    %1215 = vmatpush1.xpose.msra.mxu0 0.0
    %1216 = vmatprep.subr.mxu0 0.0
    %1217 = vmatpush1.xpose.msra.mxu0 0.0
    %1218 = vmatprep.subr.mxu0 0.0
    %1219 = vmatpush1.xpose.msra.mxu0 0.0
    %1220 = vmatprep.subr.mxu0 0.0
    %1221 = vmatpush1.xpose.msra.mxu0 0.0
    %1222 = vmatprep.subr.mxu0 0.0
    %1223 = vmatpush1.xpose.msra.mxu0 0.0
    %1224 = vmatprep.subr.mxu0 0.0
    %1225 = vmatpush1.xpose.msra.mxu0 0.0
    %1226 = vmatprep.subr.mxu0 0.0
    %1227 = vmatpush1.xpose.msra.mxu0 0.0
    %1228 = vmatprep.subr.mxu0 0.0
    %1229 = vmatpush1.xpose.msra.mxu0 0.0
    %1230 = vmatprep.subr.mxu0 0.0
    %1231 = vmatpush1.xpose.msra.mxu0 0.0
    %1232 = vmatprep.subr.mxu0 0.0
    %1233 = vmatpush1.xpose.msra.mxu0 0.0
    %1234 = vmatprep.subr.mxu0 0.0
    %1235 = vmatpush1.xpose.msra.mxu0 0.0
    %1236 = vmatprep.subr.mxu0 0.0
    %1237 = vmatpush1.xpose.msra.mxu0 0.0
    %1238 = vmatprep.subr.mxu0 0.0
    %1239 = vmatpush1.xpose.msra.mxu0 0.0
    %1240 = vmatprep.subr.mxu0 0.0
    %1241 = vmatpush1.xpose.msra.mxu0 0.0
    %1242 = vmatprep.subr.mxu0 0.0
    %1243 = vmatpush1.xpose.msra.mxu0 0.0
    %1244 = vmatprep.subr.mxu0 0.0
    %1245 = vmatpush1.xpose.msra.mxu0 0.0
    %1246 = vmatprep.subr.mxu0 0.0
    %1247 = vmatpush1.xpose.msra.mxu0 0.0
    %1248 = vmatprep.subr.mxu0 0.0
    %1249 = vmatpush1.xpose.msra.mxu0 0.0
    %1250 = vmatprep.subr.mxu0 0.0
    %1251 = vmatpush1.xpose.msra.mxu0 0.0
    %1252 = vmatprep.mubr.f32.mxu0 %v72
    %1253 = vmatmul.mubr.f32.gmra.mrb[0].mxu0 %v71
    %v1254 = vpop.f32.mrb[0].mxu0
    %v1255 = vadd.f32 0.0, %v1254
    %v1256 = vpop.f32.mrb[0].mxu0
    %1257 = vmatprep.mubr.f32.mxu0 %v74
    %1258 = vmatmul.mubr.f32.gmra.mrb[0].mxu0 %v73
    %v1259 = vpop.f32.mrb[0].mxu0
    %v1260 = vadd.f32 0.0, %v1259
    %v1261 = vpop.f32.mrb[0].mxu0
    %1262 = vmatprep.mubr.f32.mxu0 %v76
    %1263 = vmatmul.mubr.f32.gmra.mrb[0].mxu0 %v75
    %v1264 = vpop.f32.mrb[0].mxu0
    %v1265 = vadd.f32 0.0, %v1264
    %v1266 = vpop.f32.mrb[0].mxu0
    %1267 = vmatprep.mubr.f32.mxu0 %v78
    %1268 = vmatmul.mubr.f32.gmra.mrb[0].mxu0 %v77
    %v1269 = vpop.f32.mrb[0].mxu0
    %v1270 = vadd.f32 0.0, %v1269
    %v1271 = vpop.f32.mrb[0].mxu0
    %1272 = vdwg.mxu0
    %v1273 = vsub.f32 %v1255, %v1031
    %v1274 = vsub.f32 %v1260, %v1032
    %v1275 = vsub.f32 %v1265, %v1033
    %v1276 = vsub.f32 %v1270, %v1034
    %v1277 = vmul.f32 %v1184, %v1184
    %v1278 = vmul.f32 %v1185, %v1185
    %v1279 = vmul.f32 %v1186, %v1186
    %v1280 = vmul.f32 %v1187, %v1187
    %v1281 = vsel %vm107, %v1277, 0.0
    %v1282 = vsel %vm107, %v1278, 0.0
    %v1283 = vadd.f32 %v1281, %v1282
    %v1284 = vsel %vm107, %v1279, 0.0
    %v1285 = vadd.f32 %v1283, %v1284
    %v1286 = vsel %vm107, %v1280, 0.0
    %v1287 = vadd.f32 %v1285, %v1286
    %1288 = vadd.xlane.f32.xlu0 %v1287
    %v1289 = vpop.xlane.xlu0 %1288
    %v1290 = vrot.slane %v1289, 4
    %v1291 = vadd.f32 %v1289, %v1290
    %v1292 = vrot.slane %v1291, 2
    %v1293 = vadd.f32 %v1291, %v1292
    %v1294 = vrot.slane %v1293, 1
    %v1295 = vadd.f32 %v1293, %v1294
    %s1296 = vtos %v1295
    %v1297 = vstv %s1296
    %v1298 = vrsqrt.pop %v1297
    %v1299 = vmul.f32 %v1297, %v1298
    %vm1300 = vcmp.eq.f32.partialorder %v1297, inf
    %v1301 = vsel %vm1300, %v1297, %v1299
    %vm1302 = vcmp.eq.f32.partialorder %v1297, 0.0
    %v1303 = vand.u32 %v1297, 2147483648
    %v1304 = vsel %vm1302, %v1303, %v1301
    %v1305 = vmul.f32 %v1304, 0.5
    %v1306 = vmul.f32 %v1273, %v1273
    %v1307 = vmul.f32 %v1274, %v1274
    %v1308 = vmul.f32 %v1275, %v1275
    %v1309 = vmul.f32 %v1276, %v1276
    %v1310 = vsel %vm107, %v1306, 0.0
    %v1311 = vsel %vm107, %v1307, 0.0
    %v1312 = vadd.f32 %v1310, %v1311
    %v1313 = vsel %vm107, %v1308, 0.0
    %v1314 = vadd.f32 %v1312, %v1313
    %v1315 = vsel %vm107, %v1309, 0.0
    %v1316 = vadd.f32 %v1314, %v1315
    %1317 = vadd.xlane.f32.xlu0 %v1316
    %v1318 = vpop.xlane.xlu0 %1317
    %v1319 = vrot.slane %v1318, 4
    %v1320 = vadd.f32 %v1318, %v1319
    %v1321 = vrot.slane %v1320, 2
    %v1322 = vadd.f32 %v1320, %v1321
    %v1323 = vrot.slane %v1322, 1
    %v1324 = vadd.f32 %v1322, %v1323
    %s1325 = vtos %v1324
    %v1326 = vstv %s1325
    %v1327 = vrsqrt.pop %v1326
    %v1328 = vmul.f32 %v1326, %v1327
    %vm1329 = vcmp.eq.f32.partialorder %v1326, inf
    %v1330 = vsel %vm1329, %v1326, %v1328
    %vm1331 = vcmp.eq.f32.partialorder %v1326, 0.0
    %v1332 = vand.u32 %v1326, 2147483648
    %v1333 = vsel %vm1331, %v1332, %v1330
    %v1334 = vmul.f32 %v1333, 0.5
    %v1335 = vadd.f32 %v1015, %v1305
    %v1336 = vadd.f32 %v1335, %v1334
    %vm1337 = vcmask 0
    %1338 = vst.msk [vmem:[#allocation5] sm:$0x1] %vm1337, %v1336
    %v1339 = vrsqrt.pop %v79
    %v1340 = vmul.f32 %v79, %v1339
    %vm1341 = vcmp.eq.f32.partialorder %v79, inf
    %v1342 = vsel %vm1341, %v79, %v1340
    %vm1343 = vcmp.eq.f32.partialorder %v79, 0.0
    %v1344 = vand.u32 %v79, 2147483648
    %v1345 = vsel %vm1343, %v1344, %v1342
    %v1347 = vlaneseq
    %v1348 = vshrl.u32 %v1347, 7
    %v1349 = vsub.s32 0, %v1348
    %v1350 = vrot.slane %v1345, %v1349
    %v1352 = vmul.f32 %v39, %v1350
    %v1353 = vmul.f32 %v40, %v1350
    %v1354 = vmul.f32 %v41, %v1350
    %v1355 = vmul.f32 %v42, %v1350
    %v1356 = vmul.f32 %v43, %v1350
    %v1357 = vmul.f32 %v44, %v1350
    %v1358 = vmul.f32 %v45, %v1350
    %v1359 = vmul.f32 %v46, %v1350
    %v1360 = vmul.f32 %v47, %v1350
    %v1361 = vmul.f32 %v48, %v1350
    %v1362 = vmul.f32 %v49, %v1350
    %v1363 = vmul.f32 %v50, %v1350
    %v1364 = vmul.f32 %v51, %v1350
    %v1365 = vmul.f32 %v52, %v1350
    %v1366 = vmul.f32 %v53, %v1350
    %v1367 = vmul.f32 %v54, %v1350
    %v1368 = vmul.f32 %v55, %v1350
    %v1369 = vmul.f32 %v56, %v1350
    %v1370 = vmul.f32 %v57, %v1350
    %v1371 = vmul.f32 %v58, %v1350
    %v1372 = vmul.f32 %v59, %v1350
    %v1373 = vmul.f32 %v60, %v1350
    %v1374 = vmul.f32 %v61, %v1350
    %v1375 = vmul.f32 %v62, %v1350
    %v1376 = vmul.f32 %v63, %v1350
    %v1377 = vmul.f32 %v64, %v1350
    %v1378 = vmul.f32 %v65, %v1350
    %v1379 = vmul.f32 %v66, %v1350
    %v1380 = vmul.f32 %v67, %v1350
    %v1381 = vmul.f32 %v68, %v1350
    %v1382 = vmul.f32 %v69, %v1350
    %v1383 = vmul.f32 %v70, %v1350
    %1384 = vst.msk [vmem:[%s6] sm:$0xff] %vm107, %v1352
    %1385 = vst.msk [vmem:[%s6 + $0x8] sm:$0xff] %vm107, %v1353
    %1386 = vst.msk [vmem:[%s6 + $0x10] sm:$0xff] %vm107, %v1354
    %1387 = vst.msk [vmem:[%s6 + $0x18] sm:$0xff] %vm107, %v1355
    %1388 = vst.msk [vmem:[%s6 + $0x20] sm:$0xff] %vm107, %v1356
    %1389 = vst.msk [vmem:[%s6 + $0x28] sm:$0xff] %vm107, %v1357
    %1390 = vst.msk [vmem:[%s6 + $0x30] sm:$0xff] %vm107, %v1358
    %1391 = vst.msk [vmem:[%s6 + $0x38] sm:$0xff] %vm107, %v1359
    %1392 = vst.msk [vmem:[%s6 + $0x40] sm:$0xff] %vm107, %v1360
    %1393 = vst.msk [vmem:[%s6 + $0x48] sm:$0xff] %vm107, %v1361
    %1394 = vst.msk [vmem:[%s6 + $0x50] sm:$0xff] %vm107, %v1362
    %1395 = vst.msk [vmem:[%s6 + $0x58] sm:$0xff] %vm107, %v1363
    %1396 = vst.msk [vmem:[%s6 + $0x60] sm:$0xff] %vm107, %v1364
    %1397 = vst.msk [vmem:[%s6 + $0x68] sm:$0xff] %vm107, %v1365
    %1398 = vst.msk [vmem:[%s6 + $0x70] sm:$0xff] %vm107, %v1366
    %1399 = vst.msk [vmem:[%s6 + $0x78] sm:$0xff] %vm107, %v1367
    %1400 = vst.msk [vmem:[%s6 + $0x80] sm:$0xff] %vm107, %v1368
    %1401 = vst.msk [vmem:[%s6 + $0x88] sm:$0xff] %vm107, %v1369
    %1402 = vst.msk [vmem:[%s6 + $0x90] sm:$0xff] %vm107, %v1370
    %1403 = vst.msk [vmem:[%s6 + $0x98] sm:$0xff] %vm107, %v1371
    %1404 = vst.msk [vmem:[%s6 + $0xa0] sm:$0xff] %vm107, %v1372
    %1405 = vst.msk [vmem:[%s6 + $0xa8] sm:$0xff] %vm107, %v1373
    %1406 = vst.msk [vmem:[%s6 + $0xb0] sm:$0xff] %vm107, %v1374
    %1407 = vst.msk [vmem:[%s6 + $0xb8] sm:$0xff] %vm107, %v1375
    %1408 = vst.msk [vmem:[%s6 + $0xc0] sm:$0xff] %vm107, %v1376
    %1409 = vst.msk [vmem:[%s6 + $0xc8] sm:$0xff] %vm107, %v1377
    %1410 = vst.msk [vmem:[%s6 + $0xd0] sm:$0xff] %vm107, %v1378
    %1411 = vst.msk [vmem:[%s6 + $0xd8] sm:$0xff] %vm107, %v1379
    %1412 = vst.msk [vmem:[%s6 + $0xe0] sm:$0xff] %vm107, %v1380
    %1413 = vst.msk [vmem:[%s6 + $0xe8] sm:$0xff] %vm107, %v1381
    %1414 = vst.msk [vmem:[%s6 + $0xf0] sm:$0xff] %vm107, %v1382
    %1415 = vst.msk [vmem:[%s6 + $0xf8] sm:$0xff] %vm107, %v1383
    %v1416 = vrsqrt.pop %v80
    %v1417 = vmul.f32 %v80, %v1416
    %vm1418 = vcmp.eq.f32.partialorder %v80, inf
    %v1419 = vsel %vm1418, %v80, %v1417
    %vm1420 = vcmp.eq.f32.partialorder %v80, 0.0
    %v1421 = vand.u32 %v80, 2147483648
    %v1422 = vsel %vm1420, %v1421, %v1419
    %v1423 = vrsqrt.pop %v81
    %v1424 = vmul.f32 %v81, %v1423
    %vm1425 = vcmp.eq.f32.partialorder %v81, inf
    %v1426 = vsel %vm1425, %v81, %v1424
    %vm1427 = vcmp.eq.f32.partialorder %v81, 0.0
    %v1428 = vand.u32 %v81, 2147483648
    %v1429 = vsel %vm1427, %v1428, %v1426
    %v1430 = vrsqrt.pop %v82
    %v1431 = vmul.f32 %v82, %v1430
    %vm1432 = vcmp.eq.f32.partialorder %v82, inf
    %v1433 = vsel %vm1432, %v82, %v1431
    %vm1434 = vcmp.eq.f32.partialorder %v82, 0.0
    %v1435 = vand.u32 %v82, 2147483648
    %v1436 = vsel %vm1434, %v1435, %v1433
    %v1437 = vrsqrt.pop %v83
    %v1438 = vmul.f32 %v83, %v1437
    %vm1439 = vcmp.eq.f32.partialorder %v83, inf
    %v1440 = vsel %vm1439, %v83, %v1438
    %vm1441 = vcmp.eq.f32.partialorder %v83, 0.0
    %v1442 = vand.u32 %v83, 2147483648
    %v1443 = vsel %vm1441, %v1442, %v1440
    %1445 = vset.pattern.permute.xlu0 0
    %1446 = vperm.xlu0 %1445, %v1422
    %v1447 = vpop.permute.xlu0 %1446
    %1450 = vset.pattern.permute.xlu0 0
    %1451 = vperm.xlu0 %1450, %v1429
    %v1452 = vpop.permute.xlu0 %1451
    %1455 = vset.pattern.permute.xlu0 0
    %1456 = vperm.xlu0 %1455, %v1436
    %v1457 = vpop.permute.xlu0 %1456
    %1460 = vset.pattern.permute.xlu0 0
    %1461 = vperm.xlu0 %1460, %v1443
    %v1462 = vpop.permute.xlu0 %1461
    %v1464 = vmul.f32 %v1447, %v71
    %v1465 = vmul.f32 %v1447, %v72
    %v1466 = vmul.f32 %v1452, %v73
    %v1467 = vmul.f32 %v1452, %v74
    %v1468 = vmul.f32 %v1457, %v75
    %v1469 = vmul.f32 %v1457, %v76
    %v1470 = vmul.f32 %v1462, %v77
    %v1471 = vmul.f32 %v1462, %v78
    %1472 = vst [vmem:[#allocation6] sm:$0xff] %v1464
    %1473 = vst [vmem:[#allocation6 + $0x8] sm:$0xff] %v1465
    %1474 = vst [vmem:[#allocation6 + $0x10] sm:$0xff] %v1466
    %1475 = vst [vmem:[#allocation6 + $0x18] sm:$0xff] %v1467
    %1476 = vst [vmem:[#allocation6 + $0x20] sm:$0xff] %v1468
    %1477 = vst [vmem:[#allocation6 + $0x28] sm:$0xff] %v1469
    %1478 = vst [vmem:[#allocation6 + $0x30] sm:$0xff] %v1470
    %1479 = vst [vmem:[#allocation6 + $0x38] sm:$0xff] %v1471
    // Predicated region
    $region26: #{tpu_custom_call.1} parent=1 // pred_check
      _
    $region27: #{tpu_custom_call.1} parent=1 // pred_check_branch
      %1481 = sbr.rel (0) target = $region29
    $region28: #{tpu_custom_call.1} parent=1 // pred_region
      %s1483 = ssub.s32 16, 16
      %1484 = vsyncadd [#allocation4], %s1483
      %s1486 = sshll.u32 [#allocation5], 4
      %s1487 = int_to_ptr.vmem [resolvable:$true] %s1486
      %1489 = dma.vmem_to_hbm [thread:$0]  %s1487, 16, %s5, [#allocation4]
    $region29: #{tpu_custom_call.1} parent=1 // pred_fallthru
      _
    // Predicated region
    $region30: #{tpu_custom_call.1} parent=1 // pred_check
      _
    $region31: #{tpu_custom_call.1} parent=1 // pred_check_branch
      %1491 = sbr.rel (0) target = $region33
    $region32: #{tpu_custom_call.1} parent=1 // pred_region
      _
    $region33: #{tpu_custom_call.1} parent=1 // pred_fallthru
      _
    // Predicated region
    $region34: #{tpu_custom_call.1} parent=1 // pred_check
      _
    $region35: #{tpu_custom_call.1} parent=1 // pred_check_branch
      %1493 = sbr.rel (0) target = $region37
    $region36: #{tpu_custom_call.1} parent=1 // pred_region
      %s1495 = ssub.s32 1024, 1024
      %1496 = vsyncadd [#allocation7], %s1495
      %s1497 = sshll.u32 [#allocation6], 4
      %s1498 = int_to_ptr.vmem [resolvable:$true] %s1497
      %1503 = dma.vmem_to_hbm [thread:$0]  %s1498, 1024, %s7, [#allocation7], 256, 256, 16
    $region37: #{tpu_custom_call.1} parent=1 // pred_fallthru
      _
    // Predicated region
    $region38: #{tpu_custom_call.1} parent=1 // pred_check
      _
    $region39: #{tpu_custom_call.1} parent=1 // pred_check_branch
      %1505 = sbr.rel (0) target = $region41
    $region40: #{tpu_custom_call.1} parent=1 // pred_region
      %1506 = dma.done [#allocation4], 16
    $region41: #{tpu_custom_call.1} parent=1 // pred_fallthru
      _
    // Predicated region
    $region42: #{tpu_custom_call.1} parent=1 // pred_check
      _
    $region43: #{tpu_custom_call.1} parent=1 // pred_check_branch
      %1508 = sbr.rel (0) target = $region45
    $region44: #{tpu_custom_call.1} parent=1 // pred_region
      _
    $region45: #{tpu_custom_call.1} parent=1 // pred_fallthru
      _
    // Predicated region
    $region46: #{tpu_custom_call.1} parent=1 // pred_check
      _
    $region47: #{tpu_custom_call.1} parent=1 // pred_check_branch
      %1510 = sbr.rel (0) target = $region49
    $region48: #{tpu_custom_call.1} parent=1 // pred_region
      %1511 = dma.done [#allocation7], 1024
    $region49: #{tpu_custom_call.1} parent=1 // pred_fallthru
      _
    %1512 = vsyncpa [#allocation3], 1
    %1513 = vsyncpa [#allocation4], 1
    %1514 = vsyncpa [#allocation7], 1

</llo_original>
